<compile_context>
chip_gen: v7x
topology: tpu7x:2x2x1
jax: 0.10.0
libtpu: 0.0.40
codegen_flags: <defaults>
</compile_context>

<pallas_src>
import numpy as np
import jax
import jax.numpy as jnp
from jax.experimental import pallas as pl
from jax.experimental.pallas import tpu as pltpu


# ------------------------------ kernels ------------------------------------


def _cs_kernel_f32(x_ref, w_ref, o_ref):
    """Grid = (M, N, K), K innermost. Accumulate straight into the f32 output.

    x_ref : (kb, tm, tk)  full K extent of X, VMEM-resident (constant index)
    w_ref : (tk, tn)      streamed (K, N)-tile of the cross-stitch matrix
    o_ref : (tm, tn)      output block, resident across the K axis
    """
    k = pl.program_id(2)

    @pl.when(k == 0)
    def _init():
        o_ref[...] = jnp.zeros_like(o_ref)

    o_ref[...] += jnp.dot(
        x_ref[k], w_ref[...], preferred_element_type=jnp.float32
    )


def _cs_kernel_acc(x_ref, w_ref, o_ref, acc_ref):
    """Same as _cs_kernel_f32 but with an f32 scratch for non-f32 outputs."""
    k = pl.program_id(2)

    @pl.when(k == 0)
    def _init():
        acc_ref[...] = jnp.zeros_like(acc_ref)

    acc_ref[...] += jnp.dot(
        x_ref[k], w_ref[...], preferred_element_type=jnp.float32
    )

    @pl.when(k == pl.num_programs(2) - 1)
    def _fin():
        o_ref[...] = acc_ref[...].astype(o_ref.dtype)


# ------------------------------ helpers ------------------------------------


def _round_up(v, m):
    return ((v + m - 1) // m) * m


def _largest_divisor_tile(t, cap):
    """Largest multiple of 128 that divides t (t is a multiple of 128), <= cap."""
    cap = max(128, min(cap, t))
    best = 128
    d = 128
    while d <= cap:
        if t % d == 0:
            best = d
        d += 128
    return best


def _vmem_capacity_bytes():
    try:
        info = pltpu.get_tpu_info()
        return int(getattr(info, "vmem_capacity_bytes", 64 << 20))
    except Exception:
        return 64 << 20  # conservative (v7x per-TC size)


# ------------------------------ wrapper ------------------------------------


def cross_stitch_forward(inputs, cross_stitch_mat, *, compute_dtype=None):
    """Pallas implementation of CrossStitch.forward(*inputs).

    compute_dtype: optional dtype (e.g. jnp.bfloat16) to cast X and W to before
    the matmul; accumulation stays f32 and outputs keep the input dtype.
    """
    inputs = list(inputs)
    B = int(inputs[0].shape[0])
    input_sizes = [int(np.prod(x.shape[1:])) for x in inputs]
    t = int(sum(input_sizes))
    assert cross_stitch_mat.shape == (t, t)

    out_dtype = inputs[0].dtype

    # Glue: flatten (row-major, identical to nn.Flatten) + concat -> (B, t).
    x = jnp.concatenate([xi.reshape(B, -1) for xi in inputs], axis=1)
    W = cross_stitch_mat
    if compute_dtype is not None:
        x = x.astype(compute_dtype)
        W = W.astype(compute_dtype)
    in_dtype = x.dtype

    isz = lambda d: jnp.dtype(d).itemsize

    # ---- sizing -------------------------------------------------------------
    sublane = 8 * max(1, 4 // isz(in_dtype))  # 8 f32 / 16 bf16 / 32 int8
    t_pad = _round_up(t, 128)                 # W is ALWAYS tiled (no full-W fallback)

    vmem_cap = _vmem_capacity_bytes()
    big_vmem = vmem_cap >= (100 << 20)        # v5e/v6e: 128 MiB; v7x: 64 MiB

    tk = _largest_divisor_tile(t_pad, 2048 if big_vmem else 1024)
    tn = _largest_divisor_tile(t_pad, 1024)
    if t_pad // tn < 2 and t_pad >= 256:
        # Force >= 2 column blocks so v7x's two TensorCores both get work.
        tn = _largest_divisor_tile(t_pad, t_pad // 2)

    # Batch (M) tiling: single block for small batches, 256-row tiles otherwise.
    Bp = _round_up(max(B, sublane), sublane)
    if Bp <= 256:
        tm = Bp
    else:
        tm = 256
        Bp = _round_up(Bp, tm)

    nm, nb, kb = Bp // tm, t_pad // tn, t_pad // tk

    # ---- pad operands to the tiled extents ----------------------------------
    if (Bp - B) or (t_pad - t):
        x = jnp.pad(x, ((0, Bp - B), (0, t_pad - t)))
    if t_pad - t:
        W = jnp.pad(W, ((0, t_pad - t), (0, t_pad - t)))

    # Present X with K as a leading axis so the kernel selects its K-slab with
    # a dynamic first-axis index; X stays fully VMEM-resident (constant index
    # map => fetched once per M block, never re-streamed per grid step).
    x3 = x.reshape(Bp, kb, tk).transpose(1, 0, 2)  # (kb, Bp, tk)

    use_acc = jnp.dtype(out_dtype) != jnp.dtype(jnp.float32)
    kernel = _cs_kernel_acc if use_acc else _cs_kernel_f32
    scratch = [pltpu.VMEM((tm, tn), jnp.float32)] if use_acc else []

    # Explicit VMEM budget: resident X (counted double-buffered to be safe),
    # double-buffered W tile, double-buffered output block, optional f32 acc.
    vmem_need = (
        2 * tm * t_pad * isz(in_dtype)
        + 2 * tk * tn * isz(W.dtype)
        + 2 * tm * tn * isz(out_dtype)
        + (tm * tn * 4 if use_acc else 0)
    )
    vmem_limit = int(min(max(2 * vmem_need, 16 << 20), int(0.85 * vmem_cap)))

    out = pl.pallas_call(
        kernel,
        out_shape=jax.ShapeDtypeStruct((Bp, t_pad), out_dtype),
        grid_spec=pltpu.PrefetchScalarGridSpec(
            num_scalar_prefetch=0,
            grid=(nm, nb, kb),  # M, N parallel; K (reduction) innermost
            in_specs=[
                pl.BlockSpec((kb, tm, tk), lambda m, n, k: (0, m, 0)),  # X resident
                pl.BlockSpec((tk, tn), lambda m, n, k: (k, n)),         # W streamed
            ],
            out_specs=pl.BlockSpec((tm, tn), lambda m, n, k: (m, n)),
            scratch_shapes=scratch,
        ),
        compiler_params=pltpu.CompilerParams(
            dimension_semantics=("parallel", "parallel", "arbitrary"),
            vmem_limit_bytes=vmem_limit,
        ),
    )(x3, W)

    out = out[:B, :t]  # drop batch / feature padding

    # Glue: split and reshape back to the original input shapes.
    offsets = np.cumsum([0] + input_sizes)
    return tuple(
        out[:, offsets[i]:offsets[i + 1]].reshape(inputs[i].shape)
        for i in range(len(inputs))
    )


# ------------------------------ self-test -----------------------------------


if __name__ == "__main__":
    key = jax.random.PRNGKey(0)
    k1, k2, k3, k4, k5, k6 = jax.random.split(key, 6)

    # --- test 1: f32, t = 1536 (exercises the tiled multi-block path) --------
    x1 = jax.random.normal(k1, (2, 4, 16, 16), dtype=jnp.float32)  # 1024 feats
    x2 = jax.random.normal(k2, (2, 8, 8, 8), dtype=jnp.float32)    #  512 feats
    sizes = [int(np.prod(x1.shape[1:])), int(np.prod(x2.shape[1:]))]
    t = sum(sizes)  # 1536
    W = jnp.eye(t, dtype=jnp.float32) + 0.01 * jax.random.normal(
        k3, (t, t), dtype=jnp.float32
    )

    outs = jax.block_until_ready(cross_stitch_forward((x1, x2), W))
    concat = jnp.concatenate([x1.reshape(2, -1), x2.reshape(2, -1)], axis=1)
    ref = concat @ W
    np.testing.assert_allclose(
        np.asarray(outs[0]), np.asarray(ref[:, :sizes[0]].reshape(x1.shape)),
        rtol=1e-5, atol=1e-5)
    np.testing.assert_allclose(
        np.asarray(outs[1]), np.asarray(ref[:, sizes[0]:].reshape(x2.shape)),
        rtol=1e-5, atol=1e-5)
    assert outs[0].shape == x1.shape and outs[1].shape == x2.shape

    # --- test 2: t = 155 (not a multiple of 128) -> padding path --------------
    x3 = jax.random.normal(k4, (2, 3, 5, 7), dtype=jnp.float32)  # 105 feats
    x4 = jax.random.normal(k5, (2, 50), dtype=jnp.float32)       #  50 feats
    sizes2 = [105, 50]
    t2 = sum(sizes2)  # 155
    W2 = jnp.eye(t2, dtype=jnp.float32) + 0.01 * jax.random.normal(
        k6, (t2, t2), dtype=jnp.float32
    )
    outs2 = jax.block_until_ready(cross_stitch_forward((x3, x4), W2))
    concat2 = jnp.concatenate([x3.reshape(2, -1), x4.reshape(2, -1)], axis=1)
    ref2 = concat2 @ W2
    np.testing.assert_allclose(
        np.asarray(outs2[0]), np.asarray(ref2[:, :105].reshape(x3.shape)),
        rtol=1e-5, atol=1e-5)
    np.testing.assert_allclose(
        np.asarray(outs2[1]), np.asarray(ref2[:, 105:].reshape(x4.shape)),
        rtol=1e-5, atol=1e-5)

    # --- test 3: bf16 compute path (halves W HBM traffic), f32 accumulation ---
    outs3 = jax.block_until_ready(
        cross_stitch_forward((x1, x2), W, compute_dtype=jnp.bfloat16))
    np.testing.assert_allclose(
        np.asarray(outs3[0]), np.asarray(ref[:, :sizes[0]].reshape(x1.shape)),
        rtol=5e-2, atol=5e-2)
    np.testing.assert_allclose(
        np.asarray(outs3[1]), np.asarray(ref[:, sizes[0]:].reshape(x2.shape)),
        rtol=5e-2, atol=5e-2)

    print("KERNEL_OK")
</pallas_src>

<mosaic_0001>
module attributes {stable_mosaic.version = 11 : i64} {
  func.func @_cs_kernel_f32(%arg0: i32, %arg1: i32, %arg2: i32, %arg3: memref<2x8x768xf32, #tpu.memory_space<vmem>>, %arg4: memref<768x768xf32, #tpu.memory_space<vmem>>, %arg5: memref<8x768xf32, #tpu.memory_space<vmem>>) attributes {dimension_semantics = [#tpu.dimension_semantics<parallel>, #tpu.dimension_semantics<parallel>, #tpu.dimension_semantics<arbitrary>], iteration_bounds = array<i64: 1, 2, 2>, scalar_prefetch = 0 : i64, scratch_operands = 0 : i64, tpu.core_type = #tpu.core_type<tc>, window_params = [{transform_indices = @transform_0, window_bounds = array<i64: 2, 8, 768>}, {transform_indices = @transform_1, window_bounds = array<i64: 768, 768>}, {transform_indices = @transform_2, window_bounds = array<i64: 8, 768>}]} {
    %c0_i32 = arith.constant 0 : i32
    %0 = arith.cmpi eq, %arg2, %c0_i32 : i32
    %1 = arith.extui %0 : i1 to i32
    %c0_i32_0 = arith.constant 0 : i32
    %2 = arith.cmpi ne, %1, %c0_i32_0 : i32
    scf.if %2 {
      %cst_8 = arith.constant 0.000000e+00 : f32
      %11 = vector.broadcast %cst_8 : f32 to vector<8x768xf32>
      %c0_9 = arith.constant 0 : index
      %c0_10 = arith.constant 0 : index
      %12 = vector.load %arg5[%c0_9, %c0_10] : memref<8x768xf32, #tpu.memory_space<vmem>>, vector<8x768xf32>
      tpu.vector_store %arg5[%c0_9, %c0_10], %11 {strides = array<i32>} : memref<8x768xf32, #tpu.memory_space<vmem>>, vector<8x768xf32>,
    } else {
    }
    %c0 = arith.constant 0 : index
    %c0_1 = arith.constant 0 : index
    %3 = vector.load %arg5[%c0, %c0_1] : memref<8x768xf32, #tpu.memory_space<vmem>>, vector<8x768xf32>
    %4 = arith.index_cast %arg2 : i32 to index
    %c0_2 = arith.constant 0 : index
    %c0_3 = arith.constant 0 : index
    %5 = vector.load %arg3[%4, %c0_2, %c0_3] : memref<2x8x768xf32, #tpu.memory_space<vmem>>, vector<1x8x768xf32>
    %6 = vector.shape_cast %5 : vector<1x8x768xf32> to vector<8x768xf32>
    %c0_4 = arith.constant 0 : index
    %c0_5 = arith.constant 0 : index
    %7 = vector.load %arg4[%c0_4, %c0_5] : memref<768x768xf32, #tpu.memory_space<vmem>>, vector<768x768xf32>
    %cst = arith.constant dense<0.000000e+00> : vector<8x768xf32>
    %8 = tpu.matmul %6, %7, %cst {dimension_numbers = #tpu.dot_dimension_numbers<[1], [0], [0], [1], [0, 0, 1, 1], [], []>} : vector<8x768xf32>, vector<768x768xf32>, vector<8x768xf32> -> vector<8x768xf32>
    %9 = arith.addf %3, %8 : vector<8x768xf32>
    %c0_6 = arith.constant 0 : index
    %c0_7 = arith.constant 0 : index
    %10 = vector.load %arg5[%c0_6, %c0_7] : memref<8x768xf32, #tpu.memory_space<vmem>>, vector<8x768xf32>
    tpu.vector_store %arg5[%c0_6, %c0_7], %9 {strides = array<i32>} : memref<8x768xf32, #tpu.memory_space<vmem>>, vector<8x768xf32>,
    return
  }
  func.func @transform_0(%arg0: i32, %arg1: i32, %arg2: i32) -> (i32, i32, i32) {
    %c0_i32 = arith.constant 0 : i32
    %c0_i32_0 = arith.constant 0 : i32
    %c0_i32_1 = arith.constant 0 : i32
    return %c0_i32, %arg0, %c0_i32_0 : i32, i32, i32
  }
  func.func @transform_1(%arg0: i32, %arg1: i32, %arg2: i32) -> (i32, i32) {
    %c0_i32 = arith.constant 0 : i32
    return %arg2, %arg1 : i32, i32
  }
  func.func @transform_2(%arg0: i32, %arg1: i32, %arg2: i32) -> (i32, i32) {
    %c0_i32 = arith.constant 0 : i32
    return %arg0, %arg1 : i32, i32
  }
}

</mosaic_0001>

<llo_original>
// kernel: tpu_custom_call.1
$region0: #{tpu_custom_call.1}
  #allocation0 [shape = 'u32[]', space=smem, size = 0x4, offset = 0x4, fixed_abs, tag = 'smem constant byte address 0x4 - core index']
  #allocation1 [shape = 'u32[144,128]{1,0:T(1,128)}', space=vmem, size = 0x12000, scoped, tag = 'internal scratch']
  %s0 = inlined_call_operand.hbm [shape: f32[2,8,768], index: 0, kind: input, shape index: {}]
  %s1 = inlined_call_operand.hbm [shape: f32[1536,1536], index: 1, kind: input, shape index: {}]
  %s2 = inlined_call_operand.hbm [shape: f32[8,1536], index: 2, kind: output, shape index: {}]
  %s3 = sld [smem:[#allocation0]]
  $region53: #{tpu_custom_call.1} parent=0
    _
  %s5 = ssub.s32 1, %s3
  %s6 = scalar_select 0, %s5, %s3
  $region1: #{tpu_custom_call.1} parent=0
    #allocation2 [shape = 'u8[49152]{0}', space=vmem, size = 0xc000, scoped, tag = 'input window, operand 0, single buffered']
    #allocation3 [shape = 's32[2]{0}', space=sflag, size = 0x8, scoped, tag = 'scoped memory for tpu_custom_call.1']
    #allocation4 [shape = 's32[2]{0}', space=sflag, size = 0x8, scoped, tag = 'scoped memory for tpu_custom_call.1']
    #allocation5 [shape = 'u8[4718592]{0}', space=vmem, size = 0x480000, scoped, tag = 'input window, operand 1']
    #allocation6 [shape = 's32[2]{0}', space=sflag, size = 0x8, scoped, tag = 'scoped memory for tpu_custom_call.1']
    #allocation7 [shape = 'u8[49152]{0}', space=vmem, size = 0xc000, scoped, tag = 'output window, operand 0']
    %7 = vsyncpa [#allocation3], 0
    %8 = vsyncpa [#allocation6], 0
    %s9 = scalar_lea.sflag [#allocation6], 1
    %10 = vsyncpa %s9, 0
    %11 = vsyncpa [#allocation4], 0
    %s12 = scalar_lea.sflag [#allocation4], 1
    %13 = vsyncpa %s12, 0
    loop: start=0, step=1, limit=6
    $region2: #{tpu_custom_call.1} parent=1 // loop_pre_header
      _
    $region3: #{tpu_custom_call.1} parent=1 // loop_header
      %s15 = sphi 0, %s19
      %p16 = scmp.ge.s32.totalorder %s15, 6
      %s22 = sphi 0, %s41
      %s23 = sphi 0, %s37
      %s24 = sphi 0, %s33
      %s25 = sphi 0, %s22
      %s26 = sphi 0, %s23
      %s27 = sphi 0, %s24
      %s28 = sphi 0, %s25
      %s29 = sphi 0, %s26
      %s30 = sphi 0, %s27
      %s44 = sphi 0, %s46
      %s47 = sphi 0, %s44
      %s48 = sphi 0, %s47
      %s64 = sphi 0, %s48
      %s72 = sphi 0, %s74
      %s75 = sphi 0, %s72
      %s76 = sphi 0, %s75
      %s92 = sphi 0, %s76
      %s100 = sphi 0, %s102
      %s103 = sphi 0, %s100
      %s104 = sphi 0, %s103
      %s120 = sphi 0, %s104
    $region4: #{tpu_custom_call.1} parent=1 // loop_header_branch
      %18 = sbr.rel (%p16) target = $region8
    $region5: #{tpu_custom_call.1} parent=1 // loop_body
      %s20 = ssub.s32 %s15, 1
      %s21 = ssub.s32 %s15, 2
      %s31 = sadd.s32 1, %s24
      %p32 = scmp.ge.s32.totalorder %s31, 2
      %s33 = scalar_select %p32, 0, %s31
      %s34 = sadd.s32 1, %s23
      %s35 = scalar_select %p32, %s34, %s23
      %p36 = scmp.ge.s32.totalorder %s35, 2
      %s37 = scalar_select %p36, 0, %s35
      %s38 = sadd.s32 1, %s22
      %s39 = scalar_select %p36, %s38, %s22
      %p40 = scmp.ge.s32.totalorder %s39, 1
      %s41 = scalar_select %p40, 0, %s39
      %s42 = ssub.s32 %s22, %s41
      %p43 = scmp.eq.s32.totalorder %s42, 0
      %s45 = sadd.s32 %s44, 1
      %s46 = scalar_select %p43, %s44, %s45
      %p49 = pneg %p43
      %p50 = scmp.eq.s32.totalorder %s15, 3
      %p51 = por %p49, %p50
      %p52 = scmp.ne.s32.totalorder %s44, %s47
      %p53 = scmp.eq.s32.totalorder %s15, 0
      %p54 = por %p52, %p53
      %p55 = scmp.ne.s32.totalorder %s44, %s47
      %p56 = scmp.eq.s32.totalorder %s20, 3
      %p57 = por %p55, %p56
      %p58 = scmp.ne.s32.totalorder %s47, %s48
      %p59 = scmp.eq.s32.totalorder %s20, 0
      %p60 = por %p58, %p59
      %p61 = scmp.ne.s32.totalorder %s47, %s48
      %p62 = scmp.eq.s32.totalorder %s21, 3
      %p63 = por %p61, %p62
      %p65 = scmp.ne.s32.totalorder %s48, %s64
      %p66 = scmp.eq.s32.totalorder %s21, 0
      %p67 = por %p65, %p66
      %s68 = ssub.s32 %s24, %s33
      %s69 = ssub.s32 %s23, %s37
      %s70 = sor.u32 %s68, %s69
      %p71 = scmp.eq.s32.totalorder %s70, 0
      %s73 = sadd.s32 %s72, 1
      %s74 = scalar_select %p71, %s72, %s73
      %p77 = pneg %p71
      %p78 = scmp.eq.s32.totalorder %s15, 3
      %p79 = por %p77, %p78
      %p80 = scmp.ne.s32.totalorder %s72, %s75
      %p81 = scmp.eq.s32.totalorder %s15, 0
      %p82 = por %p80, %p81
      %p83 = scmp.ne.s32.totalorder %s72, %s75
      %p84 = scmp.eq.s32.totalorder %s20, 3
      %p85 = por %p83, %p84
      %p86 = scmp.ne.s32.totalorder %s75, %s76
      %p87 = scmp.eq.s32.totalorder %s20, 0
      %p88 = por %p86, %p87
      %p89 = scmp.ne.s32.totalorder %s75, %s76
      %p90 = scmp.eq.s32.totalorder %s21, 3
      %p91 = por %p89, %p90
      %p93 = scmp.ne.s32.totalorder %s76, %s92
      %p94 = scmp.eq.s32.totalorder %s21, 0
      %p95 = por %p93, %p94
      %s96 = ssub.s32 %s22, %s41
      %s97 = ssub.s32 %s23, %s37
      %s98 = sor.u32 %s96, %s97
      %p99 = scmp.eq.s32.totalorder %s98, 0
      %s101 = sadd.s32 %s100, 1
      %s102 = scalar_select %p99, %s100, %s101
      %p105 = pneg %p99
      %p106 = scmp.eq.s32.totalorder %s15, 3
      %p107 = por %p105, %p106
      %p108 = scmp.ne.s32.totalorder %s100, %s103
      %p109 = scmp.eq.s32.totalorder %s15, 0
      %p110 = por %p108, %p109
      %p111 = scmp.ne.s32.totalorder %s100, %s103
      %p112 = scmp.eq.s32.totalorder %s20, 3
      %p113 = por %p111, %p112
      %p114 = scmp.ne.s32.totalorder %s103, %s104
      %p115 = scmp.eq.s32.totalorder %s20, 0
      %p116 = por %p114, %p115
      %p117 = scmp.ne.s32.totalorder %s103, %s104
      %p118 = scmp.eq.s32.totalorder %s21, 3
      %p119 = por %p117, %p118
      %p121 = scmp.ne.s32.totalorder %s104, %s120
      %p122 = scmp.eq.s32.totalorder %s21, 0
      %p123 = por %p121, %p122
      %p124 = scmp.le.s32.totalorder 1, %s15
      %p125 = scmp.lt.s32.totalorder %s15, 5
      %p126 = pnand %p124, %p125
      %p127 = pneg %p126
      // Predicated region
      $region9: #{tpu_custom_call.1} parent=5 // pred_check
        _
      $region10: #{tpu_custom_call.1} parent=5 // pred_check_branch
        %129 = sbr.rel (%p126) target = $region12
      $region11: #{tpu_custom_call.1} parent=5 // pred_region
        %s130 = ssub.s32 %s15, 1
        // Predicated region
        $region13: #{tpu_custom_call.1} parent=11 // pred_check
          %p131 = pneg %p60
        $region14: #{tpu_custom_call.1} parent=11 // pred_check_branch
          %133 = sbr.rel (%p131) target = $region16
        $region15: #{tpu_custom_call.1} parent=11 // pred_region
          %s135 = ssub.s32 1536, 1536
          %136 = vsyncadd [#allocation3], %s135
          %s137 = smul.addr %s25, 6
          %s138 = smul.addr %s137, 128
          %s139 = scalar_lea.hbm %s0, %s138
          %s140 = sshll.u32 [#allocation2], 4
          %s141 = int_to_ptr.vmem [resolvable:$true] %s140
          %146 = dma.hbm_to_vmem [thread:$0]  %s139, 1536, %s141, [#allocation3], 768, 768, 48
        $region16: #{tpu_custom_call.1} parent=11 // pred_fallthru
          _
      $region12: #{tpu_custom_call.1} parent=5 // pred_fallthru
        _
      %p147 = scmp.lt.s32.totalorder %s15, 4
      // Predicated region
      $region17: #{tpu_custom_call.1} parent=5 // pred_check
        %p148 = pneg %p147
      $region18: #{tpu_custom_call.1} parent=5 // pred_check_branch
        %150 = sbr.rel (%p148) target = $region20
      $region19: #{tpu_custom_call.1} parent=5 // pred_region
        // Predicated region
        $region21: #{tpu_custom_call.1} parent=19 // pred_check
          %p151 = pneg %p82
        $region22: #{tpu_custom_call.1} parent=19 // pred_check_branch
          %153 = sbr.rel (%p151) target = $region24
        $region23: #{tpu_custom_call.1} parent=19 // pred_region
          %s154 = sand.u32 %s72, 1
          %s155 = scalar_lea.sflag [#allocation6], %s154
          %s156 = sand.u32 %s72, 1
          %s157 = smul.addr %s156, 4608
          %s158 = scalar_lea.vmem [#allocation5], %s157
          %s159 = smul.u32 96, %s24
          %s160 = smul.u32 6, %s23
          %s162 = ssub.s32 73728, 73728
          %163 = vsyncadd %s155, %s162
          %s164 = smul.addr %s159, 12
          %s165 = sadd.s32 %s160, %s164
          %s166 = smul.addr %s165, 128
          %s167 = scalar_lea.hbm %s1, %s166
          %s168 = sshll.u32 %s158, 4
          %s169 = int_to_ptr.vmem [resolvable:$true] %s168
          %174 = dma.hbm_to_vmem [thread:$0]  %s167, 73728, %s169, %s155, 1536, 768, 48
        $region24: #{tpu_custom_call.1} parent=19 // pred_fallthru
          _
      $region20: #{tpu_custom_call.1} parent=5 // pred_fallthru
        _
      %p175 = scmp.le.s32.totalorder 1, %s15
      %p176 = scmp.lt.s32.totalorder %s15, 5
      %p177 = pnand %p175, %p176
      %p178 = pneg %p177
      // Predicated region
      $region25: #{tpu_custom_call.1} parent=5 // pred_check
        _
      $region26: #{tpu_custom_call.1} parent=5 // pred_check_branch
        %180 = sbr.rel (%p177) target = $region28
      $region27: #{tpu_custom_call.1} parent=5 // pred_region
        %s181 = ssub.s32 %s15, 1
        // Predicated region
        $region29: #{tpu_custom_call.1} parent=27 // pred_check
          %p182 = pneg %p60
        $region30: #{tpu_custom_call.1} parent=27 // pred_check_branch
          %184 = sbr.rel (%p182) target = $region32
        $region31: #{tpu_custom_call.1} parent=27 // pred_region
          %185 = dma.done [#allocation3], 1536
        $region32: #{tpu_custom_call.1} parent=27 // pred_fallthru
          _
        %s186 = sand.u32 %s75, 1
        %s187 = scalar_lea.sflag [#allocation6], %s186
        %s188 = sand.u32 %s75, 1
        %s189 = smul.addr %s188, 4608
        %s190 = scalar_lea.vmem [#allocation5], %s189
        // Predicated region
        $region33: #{tpu_custom_call.1} parent=27 // pred_check
          %p191 = pneg %p88
        $region34: #{tpu_custom_call.1} parent=27 // pred_check_branch
          %193 = sbr.rel (%p191) target = $region36
        $region35: #{tpu_custom_call.1} parent=27 // pred_region
          %194 = dma.done %s187, 73728
        $region36: #{tpu_custom_call.1} parent=27 // pred_fallthru
          _
        %p195 = pneg %p60
        %p196 = pneg %p57
        %s197 = sand.u32 %s75, 1
        %s198 = scalar_lea.sflag [#allocation6], %s197
        %s199 = sand.u32 %s75, 1
        %s200 = smul.addr %s199, 4608
        %s201 = scalar_lea.vmem [#allocation5], %s200
        %p202 = pneg %p88
        %p203 = pneg %p85
        %p204 = pneg %p116
        %p205 = pneg %p113
        %s206 = sand.u32 %s103, 1
        %s207 = scalar_lea.sflag [#allocation4], %s206
        %s208 = sand.u32 %s103, 1
        %s209 = smul.addr %s208, 48
        %s210 = scalar_lea.vmem [#allocation7], %s209
        %s211 = smul.u32 96, %s27
        %s212 = smul.u32 6, %s26
        %s213 = smul.u32 6, %s26
        %p214 = scmp.eq.s32.totalorder %s27, 0
        // Predicated region
        $region37: #{tpu_custom_call.1} parent=27 // pred_check
          %p215 = pneg %p214
        $region38: #{tpu_custom_call.1} parent=27 // pred_check_branch
          %217 = sbr.rel (%p215) target = $region40
        $region39: #{tpu_custom_call.1} parent=27 // pred_region
          %218 = vst [vmem:[%s210] sm:$0xff] 0.0
          %219 = vst [vmem:[%s210 + $0x8] sm:$0xff] 0.0
          %220 = vst [vmem:[%s210 + $0x10] sm:$0xff] 0.0
          %221 = vst [vmem:[%s210 + $0x18] sm:$0xff] 0.0
          %222 = vst [vmem:[%s210 + $0x20] sm:$0xff] 0.0
          %223 = vst [vmem:[%s210 + $0x28] sm:$0xff] 0.0
        $region40: #{tpu_custom_call.1} parent=27 // pred_fallthru
          _
        %v224 = vld [vmem:[%s210] sm:$0xff]
        %v225 = vld [vmem:[%s210 + $0x8] sm:$0xff]
        %v226 = vld [vmem:[%s210 + $0x10] sm:$0xff]
        %v227 = vld [vmem:[%s210 + $0x18] sm:$0xff]
        %v228 = vld [vmem:[%s210 + $0x20] sm:$0xff]
        %v229 = vld [vmem:[%s210 + $0x28] sm:$0xff]
        %s230 = smul.u32 %s27, 6
        %s231 = smul.addr %s230, 8
        %s232 = scalar_lea.vmem [#allocation2], %s231
        %v233 = vld [vmem:[%s232] sm:$0xff]
        %v234 = vld [vmem:[%s232 + $0x8] sm:$0xff]
        %v235 = vld [vmem:[%s232 + $0x10] sm:$0xff]
        %v236 = vld [vmem:[%s232 + $0x18] sm:$0xff]
        %v237 = vld [vmem:[%s232 + $0x20] sm:$0xff]
        %v238 = vld [vmem:[%s232 + $0x28] sm:$0xff]
        %v239 = vld [vmem:[%s190] sm:$0xff]
        %v240 = vld [vmem:[%s190 + $0x8] sm:$0xff]
        %v241 = vld [vmem:[%s190 + $0x10] sm:$0xff]
        %v242 = vld [vmem:[%s190 + $0x18] sm:$0xff]
        %v243 = vld [vmem:[%s190 + $0x20] sm:$0xff]
        %v244 = vld [vmem:[%s190 + $0x28] sm:$0xff]
        %v245 = vld [vmem:[%s190 + $0x30] sm:$0xff]
        %v246 = vld [vmem:[%s190 + $0x38] sm:$0xff]
        %v247 = vld [vmem:[%s190 + $0x40] sm:$0xff]
        %v248 = vld [vmem:[%s190 + $0x48] sm:$0xff]
        %v249 = vld [vmem:[%s190 + $0x50] sm:$0xff]
        %v250 = vld [vmem:[%s190 + $0x58] sm:$0xff]
        %v251 = vld [vmem:[%s190 + $0x60] sm:$0xff]
        %v252 = vld [vmem:[%s190 + $0x68] sm:$0xff]
        %v253 = vld [vmem:[%s190 + $0x70] sm:$0xff]
        %v254 = vld [vmem:[%s190 + $0x78] sm:$0xff]
        %v255 = vld [vmem:[%s190 + $0x80] sm:$0xff]
        %v256 = vld [vmem:[%s190 + $0x88] sm:$0xff]
        %v257 = vld [vmem:[%s190 + $0x90] sm:$0xff]
        %v258 = vld [vmem:[%s190 + $0x98] sm:$0xff]
        %v259 = vld [vmem:[%s190 + $0xa0] sm:$0xff]
        %v260 = vld [vmem:[%s190 + $0xa8] sm:$0xff]
        %v261 = vld [vmem:[%s190 + $0xb0] sm:$0xff]
        %v262 = vld [vmem:[%s190 + $0xb8] sm:$0xff]
        %v263 = vld [vmem:[%s190 + $0xc0] sm:$0xff]
        %v264 = vld [vmem:[%s190 + $0xc8] sm:$0xff]
        %v265 = vld [vmem:[%s190 + $0xd0] sm:$0xff]
        %v266 = vld [vmem:[%s190 + $0xd8] sm:$0xff]
        %v267 = vld [vmem:[%s190 + $0xe0] sm:$0xff]
        %v268 = vld [vmem:[%s190 + $0xe8] sm:$0xff]
        %v269 = vld [vmem:[%s190 + $0xf0] sm:$0xff]
        %v270 = vld [vmem:[%s190 + $0xf8] sm:$0xff]
        %v271 = vld [vmem:[%s190 + $0x100] sm:$0xff]
        %v272 = vld [vmem:[%s190 + $0x108] sm:$0xff]
        %v273 = vld [vmem:[%s190 + $0x110] sm:$0xff]
        %v274 = vld [vmem:[%s190 + $0x118] sm:$0xff]
        %v275 = vld [vmem:[%s190 + $0x120] sm:$0xff]
        %v276 = vld [vmem:[%s190 + $0x128] sm:$0xff]
        %v277 = vld [vmem:[%s190 + $0x130] sm:$0xff]
        %v278 = vld [vmem:[%s190 + $0x138] sm:$0xff]
        %v279 = vld [vmem:[%s190 + $0x140] sm:$0xff]
        %v280 = vld [vmem:[%s190 + $0x148] sm:$0xff]
        %v281 = vld [vmem:[%s190 + $0x150] sm:$0xff]
        %v282 = vld [vmem:[%s190 + $0x158] sm:$0xff]
        %v283 = vld [vmem:[%s190 + $0x160] sm:$0xff]
        %v284 = vld [vmem:[%s190 + $0x168] sm:$0xff]
        %v285 = vld [vmem:[%s190 + $0x170] sm:$0xff]
        %v286 = vld [vmem:[%s190 + $0x178] sm:$0xff]
        %v287 = vld [vmem:[%s190 + $0x180] sm:$0xff]
        %v288 = vld [vmem:[%s190 + $0x188] sm:$0xff]
        %v289 = vld [vmem:[%s190 + $0x190] sm:$0xff]
        %v290 = vld [vmem:[%s190 + $0x198] sm:$0xff]
        %v291 = vld [vmem:[%s190 + $0x1a0] sm:$0xff]
        %v292 = vld [vmem:[%s190 + $0x1a8] sm:$0xff]
        %v293 = vld [vmem:[%s190 + $0x1b0] sm:$0xff]
        %v294 = vld [vmem:[%s190 + $0x1b8] sm:$0xff]
        %v295 = vld [vmem:[%s190 + $0x1c0] sm:$0xff]
        %v296 = vld [vmem:[%s190 + $0x1c8] sm:$0xff]
        %v297 = vld [vmem:[%s190 + $0x1d0] sm:$0xff]
        %v298 = vld [vmem:[%s190 + $0x1d8] sm:$0xff]
        %v299 = vld [vmem:[%s190 + $0x1e0] sm:$0xff]
        %v300 = vld [vmem:[%s190 + $0x1e8] sm:$0xff]
        %v301 = vld [vmem:[%s190 + $0x1f0] sm:$0xff]
        %v302 = vld [vmem:[%s190 + $0x1f8] sm:$0xff]
        %v303 = vld [vmem:[%s190 + $0x200] sm:$0xff]
        %v304 = vld [vmem:[%s190 + $0x208] sm:$0xff]
        %v305 = vld [vmem:[%s190 + $0x210] sm:$0xff]
        %v306 = vld [vmem:[%s190 + $0x218] sm:$0xff]
        %v307 = vld [vmem:[%s190 + $0x220] sm:$0xff]
        %v308 = vld [vmem:[%s190 + $0x228] sm:$0xff]
        %v309 = vld [vmem:[%s190 + $0x230] sm:$0xff]
        %v310 = vld [vmem:[%s190 + $0x238] sm:$0xff]
        %v311 = vld [vmem:[%s190 + $0x240] sm:$0xff]
        %v312 = vld [vmem:[%s190 + $0x248] sm:$0xff]
        %v313 = vld [vmem:[%s190 + $0x250] sm:$0xff]
        %v314 = vld [vmem:[%s190 + $0x258] sm:$0xff]
        %v315 = vld [vmem:[%s190 + $0x260] sm:$0xff]
        %v316 = vld [vmem:[%s190 + $0x268] sm:$0xff]
        %v317 = vld [vmem:[%s190 + $0x270] sm:$0xff]
        %v318 = vld [vmem:[%s190 + $0x278] sm:$0xff]
        %v319 = vld [vmem:[%s190 + $0x280] sm:$0xff]
        %v320 = vld [vmem:[%s190 + $0x288] sm:$0xff]
        %v321 = vld [vmem:[%s190 + $0x290] sm:$0xff]
        %v322 = vld [vmem:[%s190 + $0x298] sm:$0xff]
        %v323 = vld [vmem:[%s190 + $0x2a0] sm:$0xff]
        %v324 = vld [vmem:[%s190 + $0x2a8] sm:$0xff]
        %v325 = vld [vmem:[%s190 + $0x2b0] sm:$0xff]
        %v326 = vld [vmem:[%s190 + $0x2b8] sm:$0xff]
        %v327 = vld [vmem:[%s190 + $0x2c0] sm:$0xff]
        %v328 = vld [vmem:[%s190 + $0x2c8] sm:$0xff]
        %v329 = vld [vmem:[%s190 + $0x2d0] sm:$0xff]
        %v330 = vld [vmem:[%s190 + $0x2d8] sm:$0xff]
        %v331 = vld [vmem:[%s190 + $0x2e0] sm:$0xff]
        %v332 = vld [vmem:[%s190 + $0x2e8] sm:$0xff]
        %v333 = vld [vmem:[%s190 + $0x2f0] sm:$0xff]
        %v334 = vld [vmem:[%s190 + $0x2f8] sm:$0xff]
        %v335 = vld [vmem:[%s190 + $0x300] sm:$0xff]
        %v336 = vld [vmem:[%s190 + $0x308] sm:$0xff]
        %v337 = vld [vmem:[%s190 + $0x310] sm:$0xff]
        %v338 = vld [vmem:[%s190 + $0x318] sm:$0xff]
        %v339 = vld [vmem:[%s190 + $0x320] sm:$0xff]
        %v340 = vld [vmem:[%s190 + $0x328] sm:$0xff]
        %v341 = vld [vmem:[%s190 + $0x330] sm:$0xff]
        %v342 = vld [vmem:[%s190 + $0x338] sm:$0xff]
        %v343 = vld [vmem:[%s190 + $0x340] sm:$0xff]
        %v344 = vld [vmem:[%s190 + $0x348] sm:$0xff]
        %v345 = vld [vmem:[%s190 + $0x350] sm:$0xff]
        %v346 = vld [vmem:[%s190 + $0x358] sm:$0xff]
        %v347 = vld [vmem:[%s190 + $0x360] sm:$0xff]
        %v348 = vld [vmem:[%s190 + $0x368] sm:$0xff]
        %v349 = vld [vmem:[%s190 + $0x370] sm:$0xff]
        %v350 = vld [vmem:[%s190 + $0x378] sm:$0xff]
        %v351 = vld [vmem:[%s190 + $0x380] sm:$0xff]
        %v352 = vld [vmem:[%s190 + $0x388] sm:$0xff]
        %v353 = vld [vmem:[%s190 + $0x390] sm:$0xff]
        %v354 = vld [vmem:[%s190 + $0x398] sm:$0xff]
        %v355 = vld [vmem:[%s190 + $0x3a0] sm:$0xff]
        %v356 = vld [vmem:[%s190 + $0x3a8] sm:$0xff]
        %v357 = vld [vmem:[%s190 + $0x3b0] sm:$0xff]
        %v358 = vld [vmem:[%s190 + $0x3b8] sm:$0xff]
        %v359 = vld [vmem:[%s190 + $0x3c0] sm:$0xff]
        %v360 = vld [vmem:[%s190 + $0x3c8] sm:$0xff]
        %v361 = vld [vmem:[%s190 + $0x3d0] sm:$0xff]
        %v362 = vld [vmem:[%s190 + $0x3d8] sm:$0xff]
        %v363 = vld [vmem:[%s190 + $0x3e0] sm:$0xff]
        %v364 = vld [vmem:[%s190 + $0x3e8] sm:$0xff]
        %v365 = vld [vmem:[%s190 + $0x3f0] sm:$0xff]
        %v366 = vld [vmem:[%s190 + $0x3f8] sm:$0xff]
        %v367 = vld [vmem:[%s190 + $0x400] sm:$0xff]
        %v368 = vld [vmem:[%s190 + $0x408] sm:$0xff]
        %v369 = vld [vmem:[%s190 + $0x410] sm:$0xff]
        %v370 = vld [vmem:[%s190 + $0x418] sm:$0xff]
        %v371 = vld [vmem:[%s190 + $0x420] sm:$0xff]
        %v372 = vld [vmem:[%s190 + $0x428] sm:$0xff]
        %v373 = vld [vmem:[%s190 + $0x430] sm:$0xff]
        %v374 = vld [vmem:[%s190 + $0x438] sm:$0xff]
        %v375 = vld [vmem:[%s190 + $0x440] sm:$0xff]
        %v376 = vld [vmem:[%s190 + $0x448] sm:$0xff]
        %v377 = vld [vmem:[%s190 + $0x450] sm:$0xff]
        %v378 = vld [vmem:[%s190 + $0x458] sm:$0xff]
        %v379 = vld [vmem:[%s190 + $0x460] sm:$0xff]
        %v380 = vld [vmem:[%s190 + $0x468] sm:$0xff]
        %v381 = vld [vmem:[%s190 + $0x470] sm:$0xff]
        %v382 = vld [vmem:[%s190 + $0x478] sm:$0xff]
        %v383 = vld [vmem:[%s190 + $0x480] sm:$0xff]
        %v384 = vld [vmem:[%s190 + $0x488] sm:$0xff]
        %v385 = vld [vmem:[%s190 + $0x490] sm:$0xff]
        %v386 = vld [vmem:[%s190 + $0x498] sm:$0xff]
        %v387 = vld [vmem:[%s190 + $0x4a0] sm:$0xff]
        %v388 = vld [vmem:[%s190 + $0x4a8] sm:$0xff]
        %v389 = vld [vmem:[%s190 + $0x4b0] sm:$0xff]
        %v390 = vld [vmem:[%s190 + $0x4b8] sm:$0xff]
        %v391 = vld [vmem:[%s190 + $0x4c0] sm:$0xff]
        %v392 = vld [vmem:[%s190 + $0x4c8] sm:$0xff]
        %v393 = vld [vmem:[%s190 + $0x4d0] sm:$0xff]
        %v394 = vld [vmem:[%s190 + $0x4d8] sm:$0xff]
        %v395 = vld [vmem:[%s190 + $0x4e0] sm:$0xff]
        %v396 = vld [vmem:[%s190 + $0x4e8] sm:$0xff]
        %v397 = vld [vmem:[%s190 + $0x4f0] sm:$0xff]
        %v398 = vld [vmem:[%s190 + $0x4f8] sm:$0xff]
        %v399 = vld [vmem:[%s190 + $0x500] sm:$0xff]
        %v400 = vld [vmem:[%s190 + $0x508] sm:$0xff]
        %v401 = vld [vmem:[%s190 + $0x510] sm:$0xff]
        %v402 = vld [vmem:[%s190 + $0x518] sm:$0xff]
        %v403 = vld [vmem:[%s190 + $0x520] sm:$0xff]
        %v404 = vld [vmem:[%s190 + $0x528] sm:$0xff]
        %v405 = vld [vmem:[%s190 + $0x530] sm:$0xff]
        %v406 = vld [vmem:[%s190 + $0x538] sm:$0xff]
        %v407 = vld [vmem:[%s190 + $0x540] sm:$0xff]
        %v408 = vld [vmem:[%s190 + $0x548] sm:$0xff]
        %v409 = vld [vmem:[%s190 + $0x550] sm:$0xff]
        %v410 = vld [vmem:[%s190 + $0x558] sm:$0xff]
        %v411 = vld [vmem:[%s190 + $0x560] sm:$0xff]
        %v412 = vld [vmem:[%s190 + $0x568] sm:$0xff]
        %v413 = vld [vmem:[%s190 + $0x570] sm:$0xff]
        %v414 = vld [vmem:[%s190 + $0x578] sm:$0xff]
        %v415 = vld [vmem:[%s190 + $0x580] sm:$0xff]
        %v416 = vld [vmem:[%s190 + $0x588] sm:$0xff]
        %v417 = vld [vmem:[%s190 + $0x590] sm:$0xff]
        %v418 = vld [vmem:[%s190 + $0x598] sm:$0xff]
        %v419 = vld [vmem:[%s190 + $0x5a0] sm:$0xff]
        %v420 = vld [vmem:[%s190 + $0x5a8] sm:$0xff]
        %v421 = vld [vmem:[%s190 + $0x5b0] sm:$0xff]
        %v422 = vld [vmem:[%s190 + $0x5b8] sm:$0xff]
        %v423 = vld [vmem:[%s190 + $0x5c0] sm:$0xff]
        %v424 = vld [vmem:[%s190 + $0x5c8] sm:$0xff]
        %v425 = vld [vmem:[%s190 + $0x5d0] sm:$0xff]
        %v426 = vld [vmem:[%s190 + $0x5d8] sm:$0xff]
        %v427 = vld [vmem:[%s190 + $0x5e0] sm:$0xff]
        %v428 = vld [vmem:[%s190 + $0x5e8] sm:$0xff]
        %v429 = vld [vmem:[%s190 + $0x5f0] sm:$0xff]
        %v430 = vld [vmem:[%s190 + $0x5f8] sm:$0xff]
        %v431 = vld [vmem:[%s190 + $0x600] sm:$0xff]
        %v432 = vld [vmem:[%s190 + $0x608] sm:$0xff]
        %v433 = vld [vmem:[%s190 + $0x610] sm:$0xff]
        %v434 = vld [vmem:[%s190 + $0x618] sm:$0xff]
        %v435 = vld [vmem:[%s190 + $0x620] sm:$0xff]
        %v436 = vld [vmem:[%s190 + $0x628] sm:$0xff]
        %v437 = vld [vmem:[%s190 + $0x630] sm:$0xff]
        %v438 = vld [vmem:[%s190 + $0x638] sm:$0xff]
        %v439 = vld [vmem:[%s190 + $0x640] sm:$0xff]
        %v440 = vld [vmem:[%s190 + $0x648] sm:$0xff]
        %v441 = vld [vmem:[%s190 + $0x650] sm:$0xff]
        %v442 = vld [vmem:[%s190 + $0x658] sm:$0xff]
        %v443 = vld [vmem:[%s190 + $0x660] sm:$0xff]
        %v444 = vld [vmem:[%s190 + $0x668] sm:$0xff]
        %v445 = vld [vmem:[%s190 + $0x670] sm:$0xff]
        %v446 = vld [vmem:[%s190 + $0x678] sm:$0xff]
        %v447 = vld [vmem:[%s190 + $0x680] sm:$0xff]
        %v448 = vld [vmem:[%s190 + $0x688] sm:$0xff]
        %v449 = vld [vmem:[%s190 + $0x690] sm:$0xff]
        %v450 = vld [vmem:[%s190 + $0x698] sm:$0xff]
        %v451 = vld [vmem:[%s190 + $0x6a0] sm:$0xff]
        %v452 = vld [vmem:[%s190 + $0x6a8] sm:$0xff]
        %v453 = vld [vmem:[%s190 + $0x6b0] sm:$0xff]
        %v454 = vld [vmem:[%s190 + $0x6b8] sm:$0xff]
        %v455 = vld [vmem:[%s190 + $0x6c0] sm:$0xff]
        %v456 = vld [vmem:[%s190 + $0x6c8] sm:$0xff]
        %v457 = vld [vmem:[%s190 + $0x6d0] sm:$0xff]
        %v458 = vld [vmem:[%s190 + $0x6d8] sm:$0xff]
        %v459 = vld [vmem:[%s190 + $0x6e0] sm:$0xff]
        %v460 = vld [vmem:[%s190 + $0x6e8] sm:$0xff]
        %v461 = vld [vmem:[%s190 + $0x6f0] sm:$0xff]
        %v462 = vld [vmem:[%s190 + $0x6f8] sm:$0xff]
        %v463 = vld [vmem:[%s190 + $0x700] sm:$0xff]
        %v464 = vld [vmem:[%s190 + $0x708] sm:$0xff]
        %v465 = vld [vmem:[%s190 + $0x710] sm:$0xff]
        %v466 = vld [vmem:[%s190 + $0x718] sm:$0xff]
        %v467 = vld [vmem:[%s190 + $0x720] sm:$0xff]
        %v468 = vld [vmem:[%s190 + $0x728] sm:$0xff]
        %v469 = vld [vmem:[%s190 + $0x730] sm:$0xff]
        %v470 = vld [vmem:[%s190 + $0x738] sm:$0xff]
        %v471 = vld [vmem:[%s190 + $0x740] sm:$0xff]
        %v472 = vld [vmem:[%s190 + $0x748] sm:$0xff]
        %v473 = vld [vmem:[%s190 + $0x750] sm:$0xff]
        %v474 = vld [vmem:[%s190 + $0x758] sm:$0xff]
        %v475 = vld [vmem:[%s190 + $0x760] sm:$0xff]
        %v476 = vld [vmem:[%s190 + $0x768] sm:$0xff]
        %v477 = vld [vmem:[%s190 + $0x770] sm:$0xff]
        %v478 = vld [vmem:[%s190 + $0x778] sm:$0xff]
        %v479 = vld [vmem:[%s190 + $0x780] sm:$0xff]
        %v480 = vld [vmem:[%s190 + $0x788] sm:$0xff]
        %v481 = vld [vmem:[%s190 + $0x790] sm:$0xff]
        %v482 = vld [vmem:[%s190 + $0x798] sm:$0xff]
        %v483 = vld [vmem:[%s190 + $0x7a0] sm:$0xff]
        %v484 = vld [vmem:[%s190 + $0x7a8] sm:$0xff]
        %v485 = vld [vmem:[%s190 + $0x7b0] sm:$0xff]
        %v486 = vld [vmem:[%s190 + $0x7b8] sm:$0xff]
        %v487 = vld [vmem:[%s190 + $0x7c0] sm:$0xff]
        %v488 = vld [vmem:[%s190 + $0x7c8] sm:$0xff]
        %v489 = vld [vmem:[%s190 + $0x7d0] sm:$0xff]
        %v490 = vld [vmem:[%s190 + $0x7d8] sm:$0xff]
        %v491 = vld [vmem:[%s190 + $0x7e0] sm:$0xff]
        %v492 = vld [vmem:[%s190 + $0x7e8] sm:$0xff]
        %v493 = vld [vmem:[%s190 + $0x7f0] sm:$0xff]
        %v494 = vld [vmem:[%s190 + $0x7f8] sm:$0xff]
        %v495 = vld [vmem:[%s190 + $0x800] sm:$0xff]
        %v496 = vld [vmem:[%s190 + $0x808] sm:$0xff]
        %v497 = vld [vmem:[%s190 + $0x810] sm:$0xff]
        %v498 = vld [vmem:[%s190 + $0x818] sm:$0xff]
        %v499 = vld [vmem:[%s190 + $0x820] sm:$0xff]
        %v500 = vld [vmem:[%s190 + $0x828] sm:$0xff]
        %v501 = vld [vmem:[%s190 + $0x830] sm:$0xff]
        %v502 = vld [vmem:[%s190 + $0x838] sm:$0xff]
        %v503 = vld [vmem:[%s190 + $0x840] sm:$0xff]
        %v504 = vld [vmem:[%s190 + $0x848] sm:$0xff]
        %v505 = vld [vmem:[%s190 + $0x850] sm:$0xff]
        %v506 = vld [vmem:[%s190 + $0x858] sm:$0xff]
        %v507 = vld [vmem:[%s190 + $0x860] sm:$0xff]
        %v508 = vld [vmem:[%s190 + $0x868] sm:$0xff]
        %v509 = vld [vmem:[%s190 + $0x870] sm:$0xff]
        %v510 = vld [vmem:[%s190 + $0x878] sm:$0xff]
        %v511 = vld [vmem:[%s190 + $0x880] sm:$0xff]
        %v512 = vld [vmem:[%s190 + $0x888] sm:$0xff]
        %v513 = vld [vmem:[%s190 + $0x890] sm:$0xff]
        %v514 = vld [vmem:[%s190 + $0x898] sm:$0xff]
        %v515 = vld [vmem:[%s190 + $0x8a0] sm:$0xff]
        %v516 = vld [vmem:[%s190 + $0x8a8] sm:$0xff]
        %v517 = vld [vmem:[%s190 + $0x8b0] sm:$0xff]
        %v518 = vld [vmem:[%s190 + $0x8b8] sm:$0xff]
        %v519 = vld [vmem:[%s190 + $0x8c0] sm:$0xff]
        %v520 = vld [vmem:[%s190 + $0x8c8] sm:$0xff]
        %v521 = vld [vmem:[%s190 + $0x8d0] sm:$0xff]
        %v522 = vld [vmem:[%s190 + $0x8d8] sm:$0xff]
        %v523 = vld [vmem:[%s190 + $0x8e0] sm:$0xff]
        %v524 = vld [vmem:[%s190 + $0x8e8] sm:$0xff]
        %v525 = vld [vmem:[%s190 + $0x8f0] sm:$0xff]
        %v526 = vld [vmem:[%s190 + $0x8f8] sm:$0xff]
        %v527 = vld [vmem:[%s190 + $0x900] sm:$0xff]
        %v528 = vld [vmem:[%s190 + $0x908] sm:$0xff]
        %v529 = vld [vmem:[%s190 + $0x910] sm:$0xff]
        %v530 = vld [vmem:[%s190 + $0x918] sm:$0xff]
        %v531 = vld [vmem:[%s190 + $0x920] sm:$0xff]
        %v532 = vld [vmem:[%s190 + $0x928] sm:$0xff]
        %v533 = vld [vmem:[%s190 + $0x930] sm:$0xff]
        %v534 = vld [vmem:[%s190 + $0x938] sm:$0xff]
        %v535 = vld [vmem:[%s190 + $0x940] sm:$0xff]
        %v536 = vld [vmem:[%s190 + $0x948] sm:$0xff]
        %v537 = vld [vmem:[%s190 + $0x950] sm:$0xff]
        %v538 = vld [vmem:[%s190 + $0x958] sm:$0xff]
        %v539 = vld [vmem:[%s190 + $0x960] sm:$0xff]
        %v540 = vld [vmem:[%s190 + $0x968] sm:$0xff]
        %v541 = vld [vmem:[%s190 + $0x970] sm:$0xff]
        %v542 = vld [vmem:[%s190 + $0x978] sm:$0xff]
        %v543 = vld [vmem:[%s190 + $0x980] sm:$0xff]
        %v544 = vld [vmem:[%s190 + $0x988] sm:$0xff]
        %v545 = vld [vmem:[%s190 + $0x990] sm:$0xff]
        %v546 = vld [vmem:[%s190 + $0x998] sm:$0xff]
        %v547 = vld [vmem:[%s190 + $0x9a0] sm:$0xff]
        %v548 = vld [vmem:[%s190 + $0x9a8] sm:$0xff]
        %v549 = vld [vmem:[%s190 + $0x9b0] sm:$0xff]
        %v550 = vld [vmem:[%s190 + $0x9b8] sm:$0xff]
        %v551 = vld [vmem:[%s190 + $0x9c0] sm:$0xff]
        %v552 = vld [vmem:[%s190 + $0x9c8] sm:$0xff]
        %v553 = vld [vmem:[%s190 + $0x9d0] sm:$0xff]
        %v554 = vld [vmem:[%s190 + $0x9d8] sm:$0xff]
        %v555 = vld [vmem:[%s190 + $0x9e0] sm:$0xff]
        %v556 = vld [vmem:[%s190 + $0x9e8] sm:$0xff]
        %v557 = vld [vmem:[%s190 + $0x9f0] sm:$0xff]
        %v558 = vld [vmem:[%s190 + $0x9f8] sm:$0xff]
        %v559 = vld [vmem:[%s190 + $0xa00] sm:$0xff]
        %v560 = vld [vmem:[%s190 + $0xa08] sm:$0xff]
        %v561 = vld [vmem:[%s190 + $0xa10] sm:$0xff]
        %v562 = vld [vmem:[%s190 + $0xa18] sm:$0xff]
        %v563 = vld [vmem:[%s190 + $0xa20] sm:$0xff]
        %v564 = vld [vmem:[%s190 + $0xa28] sm:$0xff]
        %v565 = vld [vmem:[%s190 + $0xa30] sm:$0xff]
        %v566 = vld [vmem:[%s190 + $0xa38] sm:$0xff]
        %v567 = vld [vmem:[%s190 + $0xa40] sm:$0xff]
        %v568 = vld [vmem:[%s190 + $0xa48] sm:$0xff]
        %v569 = vld [vmem:[%s190 + $0xa50] sm:$0xff]
        %v570 = vld [vmem:[%s190 + $0xa58] sm:$0xff]
        %v571 = vld [vmem:[%s190 + $0xa60] sm:$0xff]
        %v572 = vld [vmem:[%s190 + $0xa68] sm:$0xff]
        %v573 = vld [vmem:[%s190 + $0xa70] sm:$0xff]
        %v574 = vld [vmem:[%s190 + $0xa78] sm:$0xff]
        %v575 = vld [vmem:[%s190 + $0xa80] sm:$0xff]
        %v576 = vld [vmem:[%s190 + $0xa88] sm:$0xff]
        %v577 = vld [vmem:[%s190 + $0xa90] sm:$0xff]
        %v578 = vld [vmem:[%s190 + $0xa98] sm:$0xff]
        %v579 = vld [vmem:[%s190 + $0xaa0] sm:$0xff]
        %v580 = vld [vmem:[%s190 + $0xaa8] sm:$0xff]
        %v581 = vld [vmem:[%s190 + $0xab0] sm:$0xff]
        %v582 = vld [vmem:[%s190 + $0xab8] sm:$0xff]
        %v583 = vld [vmem:[%s190 + $0xac0] sm:$0xff]
        %v584 = vld [vmem:[%s190 + $0xac8] sm:$0xff]
        %v585 = vld [vmem:[%s190 + $0xad0] sm:$0xff]
        %v586 = vld [vmem:[%s190 + $0xad8] sm:$0xff]
        %v587 = vld [vmem:[%s190 + $0xae0] sm:$0xff]
        %v588 = vld [vmem:[%s190 + $0xae8] sm:$0xff]
        %v589 = vld [vmem:[%s190 + $0xaf0] sm:$0xff]
        %v590 = vld [vmem:[%s190 + $0xaf8] sm:$0xff]
        %v591 = vld [vmem:[%s190 + $0xb00] sm:$0xff]
        %v592 = vld [vmem:[%s190 + $0xb08] sm:$0xff]
        %v593 = vld [vmem:[%s190 + $0xb10] sm:$0xff]
        %v594 = vld [vmem:[%s190 + $0xb18] sm:$0xff]
        %v595 = vld [vmem:[%s190 + $0xb20] sm:$0xff]
        %v596 = vld [vmem:[%s190 + $0xb28] sm:$0xff]
        %v597 = vld [vmem:[%s190 + $0xb30] sm:$0xff]
        %v598 = vld [vmem:[%s190 + $0xb38] sm:$0xff]
        %v599 = vld [vmem:[%s190 + $0xb40] sm:$0xff]
        %v600 = vld [vmem:[%s190 + $0xb48] sm:$0xff]
        %v601 = vld [vmem:[%s190 + $0xb50] sm:$0xff]
        %v602 = vld [vmem:[%s190 + $0xb58] sm:$0xff]
        %v603 = vld [vmem:[%s190 + $0xb60] sm:$0xff]
        %v604 = vld [vmem:[%s190 + $0xb68] sm:$0xff]
        %v605 = vld [vmem:[%s190 + $0xb70] sm:$0xff]
        %v606 = vld [vmem:[%s190 + $0xb78] sm:$0xff]
        %v607 = vld [vmem:[%s190 + $0xb80] sm:$0xff]
        %v608 = vld [vmem:[%s190 + $0xb88] sm:$0xff]
        %v609 = vld [vmem:[%s190 + $0xb90] sm:$0xff]
        %v610 = vld [vmem:[%s190 + $0xb98] sm:$0xff]
        %v611 = vld [vmem:[%s190 + $0xba0] sm:$0xff]
        %v612 = vld [vmem:[%s190 + $0xba8] sm:$0xff]
        %v613 = vld [vmem:[%s190 + $0xbb0] sm:$0xff]
        %v614 = vld [vmem:[%s190 + $0xbb8] sm:$0xff]
        %v615 = vld [vmem:[%s190 + $0xbc0] sm:$0xff]
        %v616 = vld [vmem:[%s190 + $0xbc8] sm:$0xff]
        %v617 = vld [vmem:[%s190 + $0xbd0] sm:$0xff]
        %v618 = vld [vmem:[%s190 + $0xbd8] sm:$0xff]
        %v619 = vld [vmem:[%s190 + $0xbe0] sm:$0xff]
        %v620 = vld [vmem:[%s190 + $0xbe8] sm:$0xff]
        %v621 = vld [vmem:[%s190 + $0xbf0] sm:$0xff]
        %v622 = vld [vmem:[%s190 + $0xbf8] sm:$0xff]
        %v623 = vld [vmem:[%s190 + $0xc00] sm:$0xff]
        %v624 = vld [vmem:[%s190 + $0xc08] sm:$0xff]
        %v625 = vld [vmem:[%s190 + $0xc10] sm:$0xff]
        %v626 = vld [vmem:[%s190 + $0xc18] sm:$0xff]
        %v627 = vld [vmem:[%s190 + $0xc20] sm:$0xff]
        %v628 = vld [vmem:[%s190 + $0xc28] sm:$0xff]
        %v629 = vld [vmem:[%s190 + $0xc30] sm:$0xff]
        %v630 = vld [vmem:[%s190 + $0xc38] sm:$0xff]
        %v631 = vld [vmem:[%s190 + $0xc40] sm:$0xff]
        %v632 = vld [vmem:[%s190 + $0xc48] sm:$0xff]
        %v633 = vld [vmem:[%s190 + $0xc50] sm:$0xff]
        %v634 = vld [vmem:[%s190 + $0xc58] sm:$0xff]
        %v635 = vld [vmem:[%s190 + $0xc60] sm:$0xff]
        %v636 = vld [vmem:[%s190 + $0xc68] sm:$0xff]
        %v637 = vld [vmem:[%s190 + $0xc70] sm:$0xff]
        %v638 = vld [vmem:[%s190 + $0xc78] sm:$0xff]
        %v639 = vld [vmem:[%s190 + $0xc80] sm:$0xff]
        %v640 = vld [vmem:[%s190 + $0xc88] sm:$0xff]
        %v641 = vld [vmem:[%s190 + $0xc90] sm:$0xff]
        %v642 = vld [vmem:[%s190 + $0xc98] sm:$0xff]
        %v643 = vld [vmem:[%s190 + $0xca0] sm:$0xff]
        %v644 = vld [vmem:[%s190 + $0xca8] sm:$0xff]
        %v645 = vld [vmem:[%s190 + $0xcb0] sm:$0xff]
        %v646 = vld [vmem:[%s190 + $0xcb8] sm:$0xff]
        %v647 = vld [vmem:[%s190 + $0xcc0] sm:$0xff]
        %v648 = vld [vmem:[%s190 + $0xcc8] sm:$0xff]
        %v649 = vld [vmem:[%s190 + $0xcd0] sm:$0xff]
        %v650 = vld [vmem:[%s190 + $0xcd8] sm:$0xff]
        %v651 = vld [vmem:[%s190 + $0xce0] sm:$0xff]
        %v652 = vld [vmem:[%s190 + $0xce8] sm:$0xff]
        %v653 = vld [vmem:[%s190 + $0xcf0] sm:$0xff]
        %v654 = vld [vmem:[%s190 + $0xcf8] sm:$0xff]
        %v655 = vld [vmem:[%s190 + $0xd00] sm:$0xff]
        %v656 = vld [vmem:[%s190 + $0xd08] sm:$0xff]
        %v657 = vld [vmem:[%s190 + $0xd10] sm:$0xff]
        %v658 = vld [vmem:[%s190 + $0xd18] sm:$0xff]
        %v659 = vld [vmem:[%s190 + $0xd20] sm:$0xff]
        %v660 = vld [vmem:[%s190 + $0xd28] sm:$0xff]
        %v661 = vld [vmem:[%s190 + $0xd30] sm:$0xff]
        %v662 = vld [vmem:[%s190 + $0xd38] sm:$0xff]
        %v663 = vld [vmem:[%s190 + $0xd40] sm:$0xff]
        %v664 = vld [vmem:[%s190 + $0xd48] sm:$0xff]
        %v665 = vld [vmem:[%s190 + $0xd50] sm:$0xff]
        %v666 = vld [vmem:[%s190 + $0xd58] sm:$0xff]
        %v667 = vld [vmem:[%s190 + $0xd60] sm:$0xff]
        %v668 = vld [vmem:[%s190 + $0xd68] sm:$0xff]
        %v669 = vld [vmem:[%s190 + $0xd70] sm:$0xff]
        %v670 = vld [vmem:[%s190 + $0xd78] sm:$0xff]
        %v671 = vld [vmem:[%s190 + $0xd80] sm:$0xff]
        %v672 = vld [vmem:[%s190 + $0xd88] sm:$0xff]
        %v673 = vld [vmem:[%s190 + $0xd90] sm:$0xff]
        %v674 = vld [vmem:[%s190 + $0xd98] sm:$0xff]
        %v675 = vld [vmem:[%s190 + $0xda0] sm:$0xff]
        %v676 = vld [vmem:[%s190 + $0xda8] sm:$0xff]
        %v677 = vld [vmem:[%s190 + $0xdb0] sm:$0xff]
        %v678 = vld [vmem:[%s190 + $0xdb8] sm:$0xff]
        %v679 = vld [vmem:[%s190 + $0xdc0] sm:$0xff]
        %v680 = vld [vmem:[%s190 + $0xdc8] sm:$0xff]
        %v681 = vld [vmem:[%s190 + $0xdd0] sm:$0xff]
        %v682 = vld [vmem:[%s190 + $0xdd8] sm:$0xff]
        %v683 = vld [vmem:[%s190 + $0xde0] sm:$0xff]
        %v684 = vld [vmem:[%s190 + $0xde8] sm:$0xff]
        %v685 = vld [vmem:[%s190 + $0xdf0] sm:$0xff]
        %v686 = vld [vmem:[%s190 + $0xdf8] sm:$0xff]
        %v687 = vld [vmem:[%s190 + $0xe00] sm:$0xff]
        %v688 = vld [vmem:[%s190 + $0xe08] sm:$0xff]
        %v689 = vld [vmem:[%s190 + $0xe10] sm:$0xff]
        %v690 = vld [vmem:[%s190 + $0xe18] sm:$0xff]
        %v691 = vld [vmem:[%s190 + $0xe20] sm:$0xff]
        %v692 = vld [vmem:[%s190 + $0xe28] sm:$0xff]
        %v693 = vld [vmem:[%s190 + $0xe30] sm:$0xff]
        %v694 = vld [vmem:[%s190 + $0xe38] sm:$0xff]
        %v695 = vld [vmem:[%s190 + $0xe40] sm:$0xff]
        %v696 = vld [vmem:[%s190 + $0xe48] sm:$0xff]
        %v697 = vld [vmem:[%s190 + $0xe50] sm:$0xff]
        %v698 = vld [vmem:[%s190 + $0xe58] sm:$0xff]
        %v699 = vld [vmem:[%s190 + $0xe60] sm:$0xff]
        %v700 = vld [vmem:[%s190 + $0xe68] sm:$0xff]
        %v701 = vld [vmem:[%s190 + $0xe70] sm:$0xff]
        %v702 = vld [vmem:[%s190 + $0xe78] sm:$0xff]
        %v703 = vld [vmem:[%s190 + $0xe80] sm:$0xff]
        %v704 = vld [vmem:[%s190 + $0xe88] sm:$0xff]
        %v705 = vld [vmem:[%s190 + $0xe90] sm:$0xff]
        %v706 = vld [vmem:[%s190 + $0xe98] sm:$0xff]
        %v707 = vld [vmem:[%s190 + $0xea0] sm:$0xff]
        %v708 = vld [vmem:[%s190 + $0xea8] sm:$0xff]
        %v709 = vld [vmem:[%s190 + $0xeb0] sm:$0xff]
        %v710 = vld [vmem:[%s190 + $0xeb8] sm:$0xff]
        %v711 = vld [vmem:[%s190 + $0xec0] sm:$0xff]
        %v712 = vld [vmem:[%s190 + $0xec8] sm:$0xff]
        %v713 = vld [vmem:[%s190 + $0xed0] sm:$0xff]
        %v714 = vld [vmem:[%s190 + $0xed8] sm:$0xff]
        %v715 = vld [vmem:[%s190 + $0xee0] sm:$0xff]
        %v716 = vld [vmem:[%s190 + $0xee8] sm:$0xff]
        %v717 = vld [vmem:[%s190 + $0xef0] sm:$0xff]
        %v718 = vld [vmem:[%s190 + $0xef8] sm:$0xff]
        %v719 = vld [vmem:[%s190 + $0xf00] sm:$0xff]
        %v720 = vld [vmem:[%s190 + $0xf08] sm:$0xff]
        %v721 = vld [vmem:[%s190 + $0xf10] sm:$0xff]
        %v722 = vld [vmem:[%s190 + $0xf18] sm:$0xff]
        %v723 = vld [vmem:[%s190 + $0xf20] sm:$0xff]
        %v724 = vld [vmem:[%s190 + $0xf28] sm:$0xff]
        %v725 = vld [vmem:[%s190 + $0xf30] sm:$0xff]
        %v726 = vld [vmem:[%s190 + $0xf38] sm:$0xff]
        %v727 = vld [vmem:[%s190 + $0xf40] sm:$0xff]
        %v728 = vld [vmem:[%s190 + $0xf48] sm:$0xff]
        %v729 = vld [vmem:[%s190 + $0xf50] sm:$0xff]
        %v730 = vld [vmem:[%s190 + $0xf58] sm:$0xff]
        %v731 = vld [vmem:[%s190 + $0xf60] sm:$0xff]
        %v732 = vld [vmem:[%s190 + $0xf68] sm:$0xff]
        %v733 = vld [vmem:[%s190 + $0xf70] sm:$0xff]
        %v734 = vld [vmem:[%s190 + $0xf78] sm:$0xff]
        %v735 = vld [vmem:[%s190 + $0xf80] sm:$0xff]
        %v736 = vld [vmem:[%s190 + $0xf88] sm:$0xff]
        %v737 = vld [vmem:[%s190 + $0xf90] sm:$0xff]
        %v738 = vld [vmem:[%s190 + $0xf98] sm:$0xff]
        %v739 = vld [vmem:[%s190 + $0xfa0] sm:$0xff]
        %v740 = vld [vmem:[%s190 + $0xfa8] sm:$0xff]
        %v741 = vld [vmem:[%s190 + $0xfb0] sm:$0xff]
        %v742 = vld [vmem:[%s190 + $0xfb8] sm:$0xff]
        %v743 = vld [vmem:[%s190 + $0xfc0] sm:$0xff]
        %v744 = vld [vmem:[%s190 + $0xfc8] sm:$0xff]
        %v745 = vld [vmem:[%s190 + $0xfd0] sm:$0xff]
        %v746 = vld [vmem:[%s190 + $0xfd8] sm:$0xff]
        %v747 = vld [vmem:[%s190 + $0xfe0] sm:$0xff]
        %v748 = vld [vmem:[%s190 + $0xfe8] sm:$0xff]
        %v749 = vld [vmem:[%s190 + $0xff0] sm:$0xff]
        %v750 = vld [vmem:[%s190 + $0xff8] sm:$0xff]
        %v751 = vld [vmem:[%s190 + $0x1000] sm:$0xff]
        %v752 = vld [vmem:[%s190 + $0x1008] sm:$0xff]
        %v753 = vld [vmem:[%s190 + $0x1010] sm:$0xff]
        %v754 = vld [vmem:[%s190 + $0x1018] sm:$0xff]
        %v755 = vld [vmem:[%s190 + $0x1020] sm:$0xff]
        %v756 = vld [vmem:[%s190 + $0x1028] sm:$0xff]
        %v757 = vld [vmem:[%s190 + $0x1030] sm:$0xff]
        %v758 = vld [vmem:[%s190 + $0x1038] sm:$0xff]
        %v759 = vld [vmem:[%s190 + $0x1040] sm:$0xff]
        %v760 = vld [vmem:[%s190 + $0x1048] sm:$0xff]
        %v761 = vld [vmem:[%s190 + $0x1050] sm:$0xff]
        %v762 = vld [vmem:[%s190 + $0x1058] sm:$0xff]
        %v763 = vld [vmem:[%s190 + $0x1060] sm:$0xff]
        %v764 = vld [vmem:[%s190 + $0x1068] sm:$0xff]
        %v765 = vld [vmem:[%s190 + $0x1070] sm:$0xff]
        %v766 = vld [vmem:[%s190 + $0x1078] sm:$0xff]
        %v767 = vld [vmem:[%s190 + $0x1080] sm:$0xff]
        %v768 = vld [vmem:[%s190 + $0x1088] sm:$0xff]
        %v769 = vld [vmem:[%s190 + $0x1090] sm:$0xff]
        %v770 = vld [vmem:[%s190 + $0x1098] sm:$0xff]
        %v771 = vld [vmem:[%s190 + $0x10a0] sm:$0xff]
        %v772 = vld [vmem:[%s190 + $0x10a8] sm:$0xff]
        %v773 = vld [vmem:[%s190 + $0x10b0] sm:$0xff]
        %v774 = vld [vmem:[%s190 + $0x10b8] sm:$0xff]
        %v775 = vld [vmem:[%s190 + $0x10c0] sm:$0xff]
        %v776 = vld [vmem:[%s190 + $0x10c8] sm:$0xff]
        %v777 = vld [vmem:[%s190 + $0x10d0] sm:$0xff]
        %v778 = vld [vmem:[%s190 + $0x10d8] sm:$0xff]
        %v779 = vld [vmem:[%s190 + $0x10e0] sm:$0xff]
        %v780 = vld [vmem:[%s190 + $0x10e8] sm:$0xff]
        %v781 = vld [vmem:[%s190 + $0x10f0] sm:$0xff]
        %v782 = vld [vmem:[%s190 + $0x10f8] sm:$0xff]
        %v783 = vld [vmem:[%s190 + $0x1100] sm:$0xff]
        %v784 = vld [vmem:[%s190 + $0x1108] sm:$0xff]
        %v785 = vld [vmem:[%s190 + $0x1110] sm:$0xff]
        %v786 = vld [vmem:[%s190 + $0x1118] sm:$0xff]
        %v787 = vld [vmem:[%s190 + $0x1120] sm:$0xff]
        %v788 = vld [vmem:[%s190 + $0x1128] sm:$0xff]
        %v789 = vld [vmem:[%s190 + $0x1130] sm:$0xff]
        %v790 = vld [vmem:[%s190 + $0x1138] sm:$0xff]
        %v791 = vld [vmem:[%s190 + $0x1140] sm:$0xff]
        %v792 = vld [vmem:[%s190 + $0x1148] sm:$0xff]
        %v793 = vld [vmem:[%s190 + $0x1150] sm:$0xff]
        %v794 = vld [vmem:[%s190 + $0x1158] sm:$0xff]
        %v795 = vld [vmem:[%s190 + $0x1160] sm:$0xff]
        %v796 = vld [vmem:[%s190 + $0x1168] sm:$0xff]
        %v797 = vld [vmem:[%s190 + $0x1170] sm:$0xff]
        %v798 = vld [vmem:[%s190 + $0x1178] sm:$0xff]
        %v799 = vld [vmem:[%s190 + $0x1180] sm:$0xff]
        %v800 = vld [vmem:[%s190 + $0x1188] sm:$0xff]
        %v801 = vld [vmem:[%s190 + $0x1190] sm:$0xff]
        %v802 = vld [vmem:[%s190 + $0x1198] sm:$0xff]
        %v803 = vld [vmem:[%s190 + $0x11a0] sm:$0xff]
        %v804 = vld [vmem:[%s190 + $0x11a8] sm:$0xff]
        %v805 = vld [vmem:[%s190 + $0x11b0] sm:$0xff]
        %v806 = vld [vmem:[%s190 + $0x11b8] sm:$0xff]
        %v807 = vld [vmem:[%s190 + $0x11c0] sm:$0xff]
        %v808 = vld [vmem:[%s190 + $0x11c8] sm:$0xff]
        %v809 = vld [vmem:[%s190 + $0x11d0] sm:$0xff]
        %v810 = vld [vmem:[%s190 + $0x11d8] sm:$0xff]
        %v811 = vld [vmem:[%s190 + $0x11e0] sm:$0xff]
        %v812 = vld [vmem:[%s190 + $0x11e8] sm:$0xff]
        %v813 = vld [vmem:[%s190 + $0x11f0] sm:$0xff]
        %v814 = vld [vmem:[%s190 + $0x11f8] sm:$0xff]
        %815 = vmatprep.subr.mxu0 %v240
        %816 = vmatpush1.msra.mxu0 %v239
        %817 = vmatprep.subr.mxu0 %v246
        %818 = vmatpush1.msra.mxu0 %v245
        %819 = vmatprep.subr.mxu0 %v252
        %820 = vmatpush1.msra.mxu0 %v251
        %821 = vmatprep.subr.mxu0 %v258
        %822 = vmatpush1.msra.mxu0 %v257
        %823 = vmatprep.subr.mxu0 %v264
        %824 = vmatpush1.msra.mxu0 %v263
        %825 = vmatprep.subr.mxu0 %v270
        %826 = vmatpush1.msra.mxu0 %v269
        %827 = vmatprep.subr.mxu0 %v276
        %828 = vmatpush1.msra.mxu0 %v275
        %829 = vmatprep.subr.mxu0 %v282
        %830 = vmatpush1.msra.mxu0 %v281
        %831 = vmatprep.subr.mxu0 %v288
        %832 = vmatpush1.msra.mxu0 %v287
        %833 = vmatprep.subr.mxu0 %v294
        %834 = vmatpush1.msra.mxu0 %v293
        %835 = vmatprep.subr.mxu0 %v300
        %836 = vmatpush1.msra.mxu0 %v299
        %837 = vmatprep.subr.mxu0 %v306
        %838 = vmatpush1.msra.mxu0 %v305
        %839 = vmatprep.subr.mxu0 %v312
        %840 = vmatpush1.msra.mxu0 %v311
        %841 = vmatprep.subr.mxu0 %v318
        %842 = vmatpush1.msra.mxu0 %v317
        %843 = vmatprep.subr.mxu0 %v324
        %844 = vmatpush1.msra.mxu0 %v323
        %845 = vmatprep.subr.mxu0 %v330
        %846 = vmatpush1.msra.mxu0 %v329
        %847 = vmatprep.subr.mxu0 %v336
        %848 = vmatpush1.msra.mxu0 %v335
        %849 = vmatprep.subr.mxu0 %v342
        %850 = vmatpush1.msra.mxu0 %v341
        %851 = vmatprep.subr.mxu0 %v348
        %852 = vmatpush1.msra.mxu0 %v347
        %853 = vmatprep.subr.mxu0 %v354
        %854 = vmatpush1.msra.mxu0 %v353
        %855 = vmatprep.subr.mxu0 %v360
        %856 = vmatpush1.msra.mxu0 %v359
        %857 = vmatprep.subr.mxu0 %v366
        %858 = vmatpush1.msra.mxu0 %v365
        %859 = vmatprep.subr.mxu0 %v372
        %860 = vmatpush1.msra.mxu0 %v371
        %861 = vmatprep.subr.mxu0 %v378
        %862 = vmatpush1.msra.mxu0 %v377
        %863 = vmatprep.subr.mxu0 %v384
        %864 = vmatpush1.msra.mxu0 %v383
        %865 = vmatprep.subr.mxu0 %v390
        %866 = vmatpush1.msra.mxu0 %v389
        %867 = vmatprep.subr.mxu0 %v396
        %868 = vmatpush1.msra.mxu0 %v395
        %869 = vmatprep.subr.mxu0 %v402
        %870 = vmatpush1.msra.mxu0 %v401
        %871 = vmatprep.subr.mxu0 %v408
        %872 = vmatpush1.msra.mxu0 %v407
        %873 = vmatprep.subr.mxu0 %v414
        %874 = vmatpush1.msra.mxu0 %v413
        %875 = vmatprep.subr.mxu0 %v420
        %876 = vmatpush1.msra.mxu0 %v419
        %877 = vmatprep.subr.mxu0 %v426
        %878 = vmatpush1.msra.mxu0 %v425
        %879 = vmatprep.mubr.f32.mxu0 %v234
        %880 = vmatmul.mubr.f32.gmra.mrb[0].mxu0 %v233
        %v881 = vpop.f32.mrb[0].mxu0
        %v882 = vadd.f32 0.0, %v881
        %v883 = vpop.f32.mrb[0].mxu0
        %v884 = vadd.f32 0.0, %v883
        %885 = vdwg.mxu0
        %886 = vmatprep.subr.mxu0 %v432
        %887 = vmatpush1.msra.mxu0 %v431
        %888 = vmatprep.subr.mxu0 %v438
        %889 = vmatpush1.msra.mxu0 %v437
        %890 = vmatprep.subr.mxu0 %v444
        %891 = vmatpush1.msra.mxu0 %v443
        %892 = vmatprep.subr.mxu0 %v450
        %893 = vmatpush1.msra.mxu0 %v449
        %894 = vmatprep.subr.mxu0 %v456
        %895 = vmatpush1.msra.mxu0 %v455
        %896 = vmatprep.subr.mxu0 %v462
        %897 = vmatpush1.msra.mxu0 %v461
        %898 = vmatprep.subr.mxu0 %v468
        %899 = vmatpush1.msra.mxu0 %v467
        %900 = vmatprep.subr.mxu0 %v474
        %901 = vmatpush1.msra.mxu0 %v473
        %902 = vmatprep.subr.mxu0 %v480
        %903 = vmatpush1.msra.mxu0 %v479
        %904 = vmatprep.subr.mxu0 %v486
        %905 = vmatpush1.msra.mxu0 %v485
        %906 = vmatprep.subr.mxu0 %v492
        %907 = vmatpush1.msra.mxu0 %v491
        %908 = vmatprep.subr.mxu0 %v498
        %909 = vmatpush1.msra.mxu0 %v497
        %910 = vmatprep.subr.mxu0 %v504
        %911 = vmatpush1.msra.mxu0 %v503
        %912 = vmatprep.subr.mxu0 %v510
        %913 = vmatpush1.msra.mxu0 %v509
        %914 = vmatprep.subr.mxu0 %v516
        %915 = vmatpush1.msra.mxu0 %v515
        %916 = vmatprep.subr.mxu0 %v522
        %917 = vmatpush1.msra.mxu0 %v521
        %918 = vmatprep.subr.mxu0 %v528
        %919 = vmatpush1.msra.mxu0 %v527
        %920 = vmatprep.subr.mxu0 %v534
        %921 = vmatpush1.msra.mxu0 %v533
        %922 = vmatprep.subr.mxu0 %v540
        %923 = vmatpush1.msra.mxu0 %v539
        %924 = vmatprep.subr.mxu0 %v546
        %925 = vmatpush1.msra.mxu0 %v545
        %926 = vmatprep.subr.mxu0 %v552
        %927 = vmatpush1.msra.mxu0 %v551
        %928 = vmatprep.subr.mxu0 %v558
        %929 = vmatpush1.msra.mxu0 %v557
        %930 = vmatprep.subr.mxu0 %v564
        %931 = vmatpush1.msra.mxu0 %v563
        %932 = vmatprep.subr.mxu0 %v570
        %933 = vmatpush1.msra.mxu0 %v569
        %934 = vmatprep.subr.mxu0 %v576
        %935 = vmatpush1.msra.mxu0 %v575
        %936 = vmatprep.subr.mxu0 %v582
        %937 = vmatpush1.msra.mxu0 %v581
        %938 = vmatprep.subr.mxu0 %v588
        %939 = vmatpush1.msra.mxu0 %v587
        %940 = vmatprep.subr.mxu0 %v594
        %941 = vmatpush1.msra.mxu0 %v593
        %942 = vmatprep.subr.mxu0 %v600
        %943 = vmatpush1.msra.mxu0 %v599
        %944 = vmatprep.subr.mxu0 %v606
        %945 = vmatpush1.msra.mxu0 %v605
        %946 = vmatprep.subr.mxu0 %v612
        %947 = vmatpush1.msra.mxu0 %v611
        %948 = vmatprep.subr.mxu0 %v618
        %949 = vmatpush1.msra.mxu0 %v617
        %950 = vmatprep.mubr.f32.mxu0 %v236
        %951 = vmatmul.mubr.f32.gmra.mrb[0].mxu0 %v235
        %v952 = vpop.f32.mrb[0].mxu0
        %v953 = vadd.f32 %v882, %v952
        %v954 = vpop.f32.mrb[0].mxu0
        %v955 = vadd.f32 %v884, %v954
        %956 = vdwg.mxu0
        %957 = vmatprep.subr.mxu0 %v624
        %958 = vmatpush1.msra.mxu0 %v623
        %959 = vmatprep.subr.mxu0 %v630
        %960 = vmatpush1.msra.mxu0 %v629
        %961 = vmatprep.subr.mxu0 %v636
        %962 = vmatpush1.msra.mxu0 %v635
        %963 = vmatprep.subr.mxu0 %v642
        %964 = vmatpush1.msra.mxu0 %v641
        %965 = vmatprep.subr.mxu0 %v648
        %966 = vmatpush1.msra.mxu0 %v647
        %967 = vmatprep.subr.mxu0 %v654
        %968 = vmatpush1.msra.mxu0 %v653
        %969 = vmatprep.subr.mxu0 %v660
        %970 = vmatpush1.msra.mxu0 %v659
        %971 = vmatprep.subr.mxu0 %v666
        %972 = vmatpush1.msra.mxu0 %v665
        %973 = vmatprep.subr.mxu0 %v672
        %974 = vmatpush1.msra.mxu0 %v671
        %975 = vmatprep.subr.mxu0 %v678
        %976 = vmatpush1.msra.mxu0 %v677
        %977 = vmatprep.subr.mxu0 %v684
        %978 = vmatpush1.msra.mxu0 %v683
        %979 = vmatprep.subr.mxu0 %v690
        %980 = vmatpush1.msra.mxu0 %v689
        %981 = vmatprep.subr.mxu0 %v696
        %982 = vmatpush1.msra.mxu0 %v695
        %983 = vmatprep.subr.mxu0 %v702
        %984 = vmatpush1.msra.mxu0 %v701
        %985 = vmatprep.subr.mxu0 %v708
        %986 = vmatpush1.msra.mxu0 %v707
        %987 = vmatprep.subr.mxu0 %v714
        %988 = vmatpush1.msra.mxu0 %v713
        %989 = vmatprep.subr.mxu0 %v720
        %990 = vmatpush1.msra.mxu0 %v719
        %991 = vmatprep.subr.mxu0 %v726
        %992 = vmatpush1.msra.mxu0 %v725
        %993 = vmatprep.subr.mxu0 %v732
        %994 = vmatpush1.msra.mxu0 %v731
        %995 = vmatprep.subr.mxu0 %v738
        %996 = vmatpush1.msra.mxu0 %v737
        %997 = vmatprep.subr.mxu0 %v744
        %998 = vmatpush1.msra.mxu0 %v743
        %999 = vmatprep.subr.mxu0 %v750
        %1000 = vmatpush1.msra.mxu0 %v749
        %1001 = vmatprep.subr.mxu0 %v756
        %1002 = vmatpush1.msra.mxu0 %v755
        %1003 = vmatprep.subr.mxu0 %v762
        %1004 = vmatpush1.msra.mxu0 %v761
        %1005 = vmatprep.subr.mxu0 %v768
        %1006 = vmatpush1.msra.mxu0 %v767
        %1007 = vmatprep.subr.mxu0 %v774
        %1008 = vmatpush1.msra.mxu0 %v773
        %1009 = vmatprep.subr.mxu0 %v780
        %1010 = vmatpush1.msra.mxu0 %v779
        %1011 = vmatprep.subr.mxu0 %v786
        %1012 = vmatpush1.msra.mxu0 %v785
        %1013 = vmatprep.subr.mxu0 %v792
        %1014 = vmatpush1.msra.mxu0 %v791
        %1015 = vmatprep.subr.mxu0 %v798
        %1016 = vmatpush1.msra.mxu0 %v797
        %1017 = vmatprep.subr.mxu0 %v804
        %1018 = vmatpush1.msra.mxu0 %v803
        %1019 = vmatprep.subr.mxu0 %v810
        %1020 = vmatpush1.msra.mxu0 %v809
        %1021 = vmatprep.mubr.f32.mxu0 %v238
        %1022 = vmatmul.mubr.f32.gmra.mrb[0].mxu0 %v237
        %v1023 = vpop.f32.mrb[0].mxu0
        %v1024 = vadd.f32 %v953, %v1023
        %v1025 = vpop.f32.mrb[0].mxu0
        %v1026 = vadd.f32 %v955, %v1025
        %1027 = vdwg.mxu0
        %1028 = vmatprep.subr.mxu0 %v242
        %1029 = vmatpush1.msra.mxu0 %v241
        %1030 = vmatprep.subr.mxu0 %v248
        %1031 = vmatpush1.msra.mxu0 %v247
        %1032 = vmatprep.subr.mxu0 %v254
        %1033 = vmatpush1.msra.mxu0 %v253
        %1034 = vmatprep.subr.mxu0 %v260
        %1035 = vmatpush1.msra.mxu0 %v259
        %1036 = vmatprep.subr.mxu0 %v266
        %1037 = vmatpush1.msra.mxu0 %v265
        %1038 = vmatprep.subr.mxu0 %v272
        %1039 = vmatpush1.msra.mxu0 %v271
        %1040 = vmatprep.subr.mxu0 %v278
        %1041 = vmatpush1.msra.mxu0 %v277
        %1042 = vmatprep.subr.mxu0 %v284
        %1043 = vmatpush1.msra.mxu0 %v283
        %1044 = vmatprep.subr.mxu0 %v290
        %1045 = vmatpush1.msra.mxu0 %v289
        %1046 = vmatprep.subr.mxu0 %v296
        %1047 = vmatpush1.msra.mxu0 %v295
        %1048 = vmatprep.subr.mxu0 %v302
        %1049 = vmatpush1.msra.mxu0 %v301
        %1050 = vmatprep.subr.mxu0 %v308
        %1051 = vmatpush1.msra.mxu0 %v307
        %1052 = vmatprep.subr.mxu0 %v314
        %1053 = vmatpush1.msra.mxu0 %v313
        %1054 = vmatprep.subr.mxu0 %v320
        %1055 = vmatpush1.msra.mxu0 %v319
        %1056 = vmatprep.subr.mxu0 %v326
        %1057 = vmatpush1.msra.mxu0 %v325
        %1058 = vmatprep.subr.mxu0 %v332
        %1059 = vmatpush1.msra.mxu0 %v331
        %1060 = vmatprep.subr.mxu0 %v338
        %1061 = vmatpush1.msra.mxu0 %v337
        %1062 = vmatprep.subr.mxu0 %v344
        %1063 = vmatpush1.msra.mxu0 %v343
        %1064 = vmatprep.subr.mxu0 %v350
        %1065 = vmatpush1.msra.mxu0 %v349
        %1066 = vmatprep.subr.mxu0 %v356
        %1067 = vmatpush1.msra.mxu0 %v355
        %1068 = vmatprep.subr.mxu0 %v362
        %1069 = vmatpush1.msra.mxu0 %v361
        %1070 = vmatprep.subr.mxu0 %v368
        %1071 = vmatpush1.msra.mxu0 %v367
        %1072 = vmatprep.subr.mxu0 %v374
        %1073 = vmatpush1.msra.mxu0 %v373
        %1074 = vmatprep.subr.mxu0 %v380
        %1075 = vmatpush1.msra.mxu0 %v379
        %1076 = vmatprep.subr.mxu0 %v386
        %1077 = vmatpush1.msra.mxu0 %v385
        %1078 = vmatprep.subr.mxu0 %v392
        %1079 = vmatpush1.msra.mxu0 %v391
        %1080 = vmatprep.subr.mxu0 %v398
        %1081 = vmatpush1.msra.mxu0 %v397
        %1082 = vmatprep.subr.mxu0 %v404
        %1083 = vmatpush1.msra.mxu0 %v403
        %1084 = vmatprep.subr.mxu0 %v410
        %1085 = vmatpush1.msra.mxu0 %v409
        %1086 = vmatprep.subr.mxu0 %v416
        %1087 = vmatpush1.msra.mxu0 %v415
        %1088 = vmatprep.subr.mxu0 %v422
        %1089 = vmatpush1.msra.mxu0 %v421
        %1090 = vmatprep.subr.mxu0 %v428
        %1091 = vmatpush1.msra.mxu0 %v427
        %1092 = vmatprep.mubr.f32.mxu0 %v234
        %1093 = vmatmul.mubr.f32.gmra.mrb[0].mxu0 %v233
        %v1094 = vpop.f32.mrb[0].mxu0
        %v1095 = vadd.f32 0.0, %v1094
        %v1096 = vpop.f32.mrb[0].mxu0
        %v1097 = vadd.f32 0.0, %v1096
        %1098 = vdwg.mxu0
        %1099 = vmatprep.subr.mxu0 %v434
        %1100 = vmatpush1.msra.mxu0 %v433
        %1101 = vmatprep.subr.mxu0 %v440
        %1102 = vmatpush1.msra.mxu0 %v439
        %1103 = vmatprep.subr.mxu0 %v446
        %1104 = vmatpush1.msra.mxu0 %v445
        %1105 = vmatprep.subr.mxu0 %v452
        %1106 = vmatpush1.msra.mxu0 %v451
        %1107 = vmatprep.subr.mxu0 %v458
        %1108 = vmatpush1.msra.mxu0 %v457
        %1109 = vmatprep.subr.mxu0 %v464
        %1110 = vmatpush1.msra.mxu0 %v463
        %1111 = vmatprep.subr.mxu0 %v470
        %1112 = vmatpush1.msra.mxu0 %v469
        %1113 = vmatprep.subr.mxu0 %v476
        %1114 = vmatpush1.msra.mxu0 %v475
        %1115 = vmatprep.subr.mxu0 %v482
        %1116 = vmatpush1.msra.mxu0 %v481
        %1117 = vmatprep.subr.mxu0 %v488
        %1118 = vmatpush1.msra.mxu0 %v487
        %1119 = vmatprep.subr.mxu0 %v494
        %1120 = vmatpush1.msra.mxu0 %v493
        %1121 = vmatprep.subr.mxu0 %v500
        %1122 = vmatpush1.msra.mxu0 %v499
        %1123 = vmatprep.subr.mxu0 %v506
        %1124 = vmatpush1.msra.mxu0 %v505
        %1125 = vmatprep.subr.mxu0 %v512
        %1126 = vmatpush1.msra.mxu0 %v511
        %1127 = vmatprep.subr.mxu0 %v518
        %1128 = vmatpush1.msra.mxu0 %v517
        %1129 = vmatprep.subr.mxu0 %v524
        %1130 = vmatpush1.msra.mxu0 %v523
        %1131 = vmatprep.subr.mxu0 %v530
        %1132 = vmatpush1.msra.mxu0 %v529
        %1133 = vmatprep.subr.mxu0 %v536
        %1134 = vmatpush1.msra.mxu0 %v535
        %1135 = vmatprep.subr.mxu0 %v542
        %1136 = vmatpush1.msra.mxu0 %v541
        %1137 = vmatprep.subr.mxu0 %v548
        %1138 = vmatpush1.msra.mxu0 %v547
        %1139 = vmatprep.subr.mxu0 %v554
        %1140 = vmatpush1.msra.mxu0 %v553
        %1141 = vmatprep.subr.mxu0 %v560
        %1142 = vmatpush1.msra.mxu0 %v559
        %1143 = vmatprep.subr.mxu0 %v566
        %1144 = vmatpush1.msra.mxu0 %v565
        %1145 = vmatprep.subr.mxu0 %v572
        %1146 = vmatpush1.msra.mxu0 %v571
        %1147 = vmatprep.subr.mxu0 %v578
        %1148 = vmatpush1.msra.mxu0 %v577
        %1149 = vmatprep.subr.mxu0 %v584
        %1150 = vmatpush1.msra.mxu0 %v583
        %1151 = vmatprep.subr.mxu0 %v590
        %1152 = vmatpush1.msra.mxu0 %v589
        %1153 = vmatprep.subr.mxu0 %v596
        %1154 = vmatpush1.msra.mxu0 %v595
        %1155 = vmatprep.subr.mxu0 %v602
        %1156 = vmatpush1.msra.mxu0 %v601
        %1157 = vmatprep.subr.mxu0 %v608
        %1158 = vmatpush1.msra.mxu0 %v607
        %1159 = vmatprep.subr.mxu0 %v614
        %1160 = vmatpush1.msra.mxu0 %v613
        %1161 = vmatprep.subr.mxu0 %v620
        %1162 = vmatpush1.msra.mxu0 %v619
        %1163 = vmatprep.mubr.f32.mxu0 %v236
        %1164 = vmatmul.mubr.f32.gmra.mrb[0].mxu0 %v235
        %v1165 = vpop.f32.mrb[0].mxu0
        %v1166 = vadd.f32 %v1095, %v1165
        %v1167 = vpop.f32.mrb[0].mxu0
        %v1168 = vadd.f32 %v1097, %v1167
        %1169 = vdwg.mxu0
        %1170 = vmatprep.subr.mxu0 %v626
        %1171 = vmatpush1.msra.mxu0 %v625
        %1172 = vmatprep.subr.mxu0 %v632
        %1173 = vmatpush1.msra.mxu0 %v631
        %1174 = vmatprep.subr.mxu0 %v638
        %1175 = vmatpush1.msra.mxu0 %v637
        %1176 = vmatprep.subr.mxu0 %v644
        %1177 = vmatpush1.msra.mxu0 %v643
        %1178 = vmatprep.subr.mxu0 %v650
        %1179 = vmatpush1.msra.mxu0 %v649
        %1180 = vmatprep.subr.mxu0 %v656
        %1181 = vmatpush1.msra.mxu0 %v655
        %1182 = vmatprep.subr.mxu0 %v662
        %1183 = vmatpush1.msra.mxu0 %v661
        %1184 = vmatprep.subr.mxu0 %v668
        %1185 = vmatpush1.msra.mxu0 %v667
        %1186 = vmatprep.subr.mxu0 %v674
        %1187 = vmatpush1.msra.mxu0 %v673
        %1188 = vmatprep.subr.mxu0 %v680
        %1189 = vmatpush1.msra.mxu0 %v679
        %1190 = vmatprep.subr.mxu0 %v686
        %1191 = vmatpush1.msra.mxu0 %v685
        %1192 = vmatprep.subr.mxu0 %v692
        %1193 = vmatpush1.msra.mxu0 %v691
        %1194 = vmatprep.subr.mxu0 %v698
        %1195 = vmatpush1.msra.mxu0 %v697
        %1196 = vmatprep.subr.mxu0 %v704
        %1197 = vmatpush1.msra.mxu0 %v703
        %1198 = vmatprep.subr.mxu0 %v710
        %1199 = vmatpush1.msra.mxu0 %v709
        %1200 = vmatprep.subr.mxu0 %v716
        %1201 = vmatpush1.msra.mxu0 %v715
        %1202 = vmatprep.subr.mxu0 %v722
        %1203 = vmatpush1.msra.mxu0 %v721
        %1204 = vmatprep.subr.mxu0 %v728
        %1205 = vmatpush1.msra.mxu0 %v727
        %1206 = vmatprep.subr.mxu0 %v734
        %1207 = vmatpush1.msra.mxu0 %v733
        %1208 = vmatprep.subr.mxu0 %v740
        %1209 = vmatpush1.msra.mxu0 %v739
        %1210 = vmatprep.subr.mxu0 %v746
        %1211 = vmatpush1.msra.mxu0 %v745
        %1212 = vmatprep.subr.mxu0 %v752
        %1213 = vmatpush1.msra.mxu0 %v751
        %1214 = vmatprep.subr.mxu0 %v758
        %1215 = vmatpush1.msra.mxu0 %v757
        %1216 = vmatprep.subr.mxu0 %v764
        %1217 = vmatpush1.msra.mxu0 %v763
        %1218 = vmatprep.subr.mxu0 %v770
        %1219 = vmatpush1.msra.mxu0 %v769
        %1220 = vmatprep.subr.mxu0 %v776
        %1221 = vmatpush1.msra.mxu0 %v775
        %1222 = vmatprep.subr.mxu0 %v782
        %1223 = vmatpush1.msra.mxu0 %v781
        %1224 = vmatprep.subr.mxu0 %v788
        %1225 = vmatpush1.msra.mxu0 %v787
        %1226 = vmatprep.subr.mxu0 %v794
        %1227 = vmatpush1.msra.mxu0 %v793
        %1228 = vmatprep.subr.mxu0 %v800
        %1229 = vmatpush1.msra.mxu0 %v799
        %1230 = vmatprep.subr.mxu0 %v806
        %1231 = vmatpush1.msra.mxu0 %v805
        %1232 = vmatprep.subr.mxu0 %v812
        %1233 = vmatpush1.msra.mxu0 %v811
        %1234 = vmatprep.mubr.f32.mxu0 %v238
        %1235 = vmatmul.mubr.f32.gmra.mrb[0].mxu0 %v237
        %v1236 = vpop.f32.mrb[0].mxu0
        %v1237 = vadd.f32 %v1166, %v1236
        %v1238 = vpop.f32.mrb[0].mxu0
        %v1239 = vadd.f32 %v1168, %v1238
        %1240 = vdwg.mxu0
        %1241 = vmatprep.subr.mxu0 %v244
        %1242 = vmatpush1.msra.mxu0 %v243
        %1243 = vmatprep.subr.mxu0 %v250
        %1244 = vmatpush1.msra.mxu0 %v249
        %1245 = vmatprep.subr.mxu0 %v256
        %1246 = vmatpush1.msra.mxu0 %v255
        %1247 = vmatprep.subr.mxu0 %v262
        %1248 = vmatpush1.msra.mxu0 %v261
        %1249 = vmatprep.subr.mxu0 %v268
        %1250 = vmatpush1.msra.mxu0 %v267
        %1251 = vmatprep.subr.mxu0 %v274
        %1252 = vmatpush1.msra.mxu0 %v273
        %1253 = vmatprep.subr.mxu0 %v280
        %1254 = vmatpush1.msra.mxu0 %v279
        %1255 = vmatprep.subr.mxu0 %v286
        %1256 = vmatpush1.msra.mxu0 %v285
        %1257 = vmatprep.subr.mxu0 %v292
        %1258 = vmatpush1.msra.mxu0 %v291
        %1259 = vmatprep.subr.mxu0 %v298
        %1260 = vmatpush1.msra.mxu0 %v297
        %1261 = vmatprep.subr.mxu0 %v304
        %1262 = vmatpush1.msra.mxu0 %v303
        %1263 = vmatprep.subr.mxu0 %v310
        %1264 = vmatpush1.msra.mxu0 %v309
        %1265 = vmatprep.subr.mxu0 %v316
        %1266 = vmatpush1.msra.mxu0 %v315
        %1267 = vmatprep.subr.mxu0 %v322
        %1268 = vmatpush1.msra.mxu0 %v321
        %1269 = vmatprep.subr.mxu0 %v328
        %1270 = vmatpush1.msra.mxu0 %v327
        %1271 = vmatprep.subr.mxu0 %v334
        %1272 = vmatpush1.msra.mxu0 %v333
        %1273 = vmatprep.subr.mxu0 %v340
        %1274 = vmatpush1.msra.mxu0 %v339
        %1275 = vmatprep.subr.mxu0 %v346
        %1276 = vmatpush1.msra.mxu0 %v345
        %1277 = vmatprep.subr.mxu0 %v352
        %1278 = vmatpush1.msra.mxu0 %v351
        %1279 = vmatprep.subr.mxu0 %v358
        %1280 = vmatpush1.msra.mxu0 %v357
        %1281 = vmatprep.subr.mxu0 %v364
        %1282 = vmatpush1.msra.mxu0 %v363
        %1283 = vmatprep.subr.mxu0 %v370
        %1284 = vmatpush1.msra.mxu0 %v369
        %1285 = vmatprep.subr.mxu0 %v376
        %1286 = vmatpush1.msra.mxu0 %v375
        %1287 = vmatprep.subr.mxu0 %v382
        %1288 = vmatpush1.msra.mxu0 %v381
        %1289 = vmatprep.subr.mxu0 %v388
        %1290 = vmatpush1.msra.mxu0 %v387
        %1291 = vmatprep.subr.mxu0 %v394
        %1292 = vmatpush1.msra.mxu0 %v393
        %1293 = vmatprep.subr.mxu0 %v400
        %1294 = vmatpush1.msra.mxu0 %v399
        %1295 = vmatprep.subr.mxu0 %v406
        %1296 = vmatpush1.msra.mxu0 %v405
        %1297 = vmatprep.subr.mxu0 %v412
        %1298 = vmatpush1.msra.mxu0 %v411
        %1299 = vmatprep.subr.mxu0 %v418
        %1300 = vmatpush1.msra.mxu0 %v417
        %1301 = vmatprep.subr.mxu0 %v424
        %1302 = vmatpush1.msra.mxu0 %v423
        %1303 = vmatprep.subr.mxu0 %v430
        %1304 = vmatpush1.msra.mxu0 %v429
        %1305 = vmatprep.mubr.f32.mxu0 %v234
        %1306 = vmatmul.mubr.f32.gmra.mrb[0].mxu0 %v233
        %v1307 = vpop.f32.mrb[0].mxu0
        %v1308 = vadd.f32 0.0, %v1307
        %v1309 = vpop.f32.mrb[0].mxu0
        %v1310 = vadd.f32 0.0, %v1309
        %1311 = vdwg.mxu0
        %1312 = vmatprep.subr.mxu0 %v436
        %1313 = vmatpush1.msra.mxu0 %v435
        %1314 = vmatprep.subr.mxu0 %v442
        %1315 = vmatpush1.msra.mxu0 %v441
        %1316 = vmatprep.subr.mxu0 %v448
        %1317 = vmatpush1.msra.mxu0 %v447
        %1318 = vmatprep.subr.mxu0 %v454
        %1319 = vmatpush1.msra.mxu0 %v453
        %1320 = vmatprep.subr.mxu0 %v460
        %1321 = vmatpush1.msra.mxu0 %v459
        %1322 = vmatprep.subr.mxu0 %v466
        %1323 = vmatpush1.msra.mxu0 %v465
        %1324 = vmatprep.subr.mxu0 %v472
        %1325 = vmatpush1.msra.mxu0 %v471
        %1326 = vmatprep.subr.mxu0 %v478
        %1327 = vmatpush1.msra.mxu0 %v477
        %1328 = vmatprep.subr.mxu0 %v484
        %1329 = vmatpush1.msra.mxu0 %v483
        %1330 = vmatprep.subr.mxu0 %v490
        %1331 = vmatpush1.msra.mxu0 %v489
        %1332 = vmatprep.subr.mxu0 %v496
        %1333 = vmatpush1.msra.mxu0 %v495
        %1334 = vmatprep.subr.mxu0 %v502
        %1335 = vmatpush1.msra.mxu0 %v501
        %1336 = vmatprep.subr.mxu0 %v508
        %1337 = vmatpush1.msra.mxu0 %v507
        %1338 = vmatprep.subr.mxu0 %v514
        %1339 = vmatpush1.msra.mxu0 %v513
        %1340 = vmatprep.subr.mxu0 %v520
        %1341 = vmatpush1.msra.mxu0 %v519
        %1342 = vmatprep.subr.mxu0 %v526
        %1343 = vmatpush1.msra.mxu0 %v525
        %1344 = vmatprep.subr.mxu0 %v532
        %1345 = vmatpush1.msra.mxu0 %v531
        %1346 = vmatprep.subr.mxu0 %v538
        %1347 = vmatpush1.msra.mxu0 %v537
        %1348 = vmatprep.subr.mxu0 %v544
        %1349 = vmatpush1.msra.mxu0 %v543
        %1350 = vmatprep.subr.mxu0 %v550
        %1351 = vmatpush1.msra.mxu0 %v549
        %1352 = vmatprep.subr.mxu0 %v556
        %1353 = vmatpush1.msra.mxu0 %v555
        %1354 = vmatprep.subr.mxu0 %v562
        %1355 = vmatpush1.msra.mxu0 %v561
        %1356 = vmatprep.subr.mxu0 %v568
        %1357 = vmatpush1.msra.mxu0 %v567
        %1358 = vmatprep.subr.mxu0 %v574
        %1359 = vmatpush1.msra.mxu0 %v573
        %1360 = vmatprep.subr.mxu0 %v580
        %1361 = vmatpush1.msra.mxu0 %v579
        %1362 = vmatprep.subr.mxu0 %v586
        %1363 = vmatpush1.msra.mxu0 %v585
        %1364 = vmatprep.subr.mxu0 %v592
        %1365 = vmatpush1.msra.mxu0 %v591
        %1366 = vmatprep.subr.mxu0 %v598
        %1367 = vmatpush1.msra.mxu0 %v597
        %1368 = vmatprep.subr.mxu0 %v604
        %1369 = vmatpush1.msra.mxu0 %v603
        %1370 = vmatprep.subr.mxu0 %v610
        %1371 = vmatpush1.msra.mxu0 %v609
        %1372 = vmatprep.subr.mxu0 %v616
        %1373 = vmatpush1.msra.mxu0 %v615
        %1374 = vmatprep.subr.mxu0 %v622
        %1375 = vmatpush1.msra.mxu0 %v621
        %1376 = vmatprep.mubr.f32.mxu0 %v236
        %1377 = vmatmul.mubr.f32.gmra.mrb[0].mxu0 %v235
        %v1378 = vpop.f32.mrb[0].mxu0
        %v1379 = vadd.f32 %v1308, %v1378
        %v1380 = vpop.f32.mrb[0].mxu0
        %v1381 = vadd.f32 %v1310, %v1380
        %1382 = vdwg.mxu0
        %1383 = vmatprep.subr.mxu0 %v628
        %1384 = vmatpush1.msra.mxu0 %v627
        %1385 = vmatprep.subr.mxu0 %v634
        %1386 = vmatpush1.msra.mxu0 %v633
        %1387 = vmatprep.subr.mxu0 %v640
        %1388 = vmatpush1.msra.mxu0 %v639
        %1389 = vmatprep.subr.mxu0 %v646
        %1390 = vmatpush1.msra.mxu0 %v645
        %1391 = vmatprep.subr.mxu0 %v652
        %1392 = vmatpush1.msra.mxu0 %v651
        %1393 = vmatprep.subr.mxu0 %v658
        %1394 = vmatpush1.msra.mxu0 %v657
        %1395 = vmatprep.subr.mxu0 %v664
        %1396 = vmatpush1.msra.mxu0 %v663
        %1397 = vmatprep.subr.mxu0 %v670
        %1398 = vmatpush1.msra.mxu0 %v669
        %1399 = vmatprep.subr.mxu0 %v676
        %1400 = vmatpush1.msra.mxu0 %v675
        %1401 = vmatprep.subr.mxu0 %v682
        %1402 = vmatpush1.msra.mxu0 %v681
        %1403 = vmatprep.subr.mxu0 %v688
        %1404 = vmatpush1.msra.mxu0 %v687
        %1405 = vmatprep.subr.mxu0 %v694
        %1406 = vmatpush1.msra.mxu0 %v693
        %1407 = vmatprep.subr.mxu0 %v700
        %1408 = vmatpush1.msra.mxu0 %v699
        %1409 = vmatprep.subr.mxu0 %v706
        %1410 = vmatpush1.msra.mxu0 %v705
        %1411 = vmatprep.subr.mxu0 %v712
        %1412 = vmatpush1.msra.mxu0 %v711
        %1413 = vmatprep.subr.mxu0 %v718
        %1414 = vmatpush1.msra.mxu0 %v717
        %1415 = vmatprep.subr.mxu0 %v724
        %1416 = vmatpush1.msra.mxu0 %v723
        %1417 = vmatprep.subr.mxu0 %v730
        %1418 = vmatpush1.msra.mxu0 %v729
        %1419 = vmatprep.subr.mxu0 %v736
        %1420 = vmatpush1.msra.mxu0 %v735
        %1421 = vmatprep.subr.mxu0 %v742
        %1422 = vmatpush1.msra.mxu0 %v741
        %1423 = vmatprep.subr.mxu0 %v748
        %1424 = vmatpush1.msra.mxu0 %v747
        %1425 = vmatprep.subr.mxu0 %v754
        %1426 = vmatpush1.msra.mxu0 %v753
        %1427 = vmatprep.subr.mxu0 %v760
        %1428 = vmatpush1.msra.mxu0 %v759
        %1429 = vmatprep.subr.mxu0 %v766
        %1430 = vmatpush1.msra.mxu0 %v765
        %1431 = vmatprep.subr.mxu0 %v772
        %1432 = vmatpush1.msra.mxu0 %v771
        %1433 = vmatprep.subr.mxu0 %v778
        %1434 = vmatpush1.msra.mxu0 %v777
        %1435 = vmatprep.subr.mxu0 %v784
        %1436 = vmatpush1.msra.mxu0 %v783
        %1437 = vmatprep.subr.mxu0 %v790
        %1438 = vmatpush1.msra.mxu0 %v789
        %1439 = vmatprep.subr.mxu0 %v796
        %1440 = vmatpush1.msra.mxu0 %v795
        %1441 = vmatprep.subr.mxu0 %v802
        %1442 = vmatpush1.msra.mxu0 %v801
        %1443 = vmatprep.subr.mxu0 %v808
        %1444 = vmatpush1.msra.mxu0 %v807
        %1445 = vmatprep.subr.mxu0 %v814
        %1446 = vmatpush1.msra.mxu0 %v813
        %1447 = vmatprep.mubr.f32.mxu0 %v238
        %1448 = vmatmul.mubr.f32.gmra.mrb[0].mxu0 %v237
        %v1449 = vpop.f32.mrb[0].mxu0
        %v1450 = vadd.f32 %v1379, %v1449
        %v1451 = vpop.f32.mrb[0].mxu0
        %v1452 = vadd.f32 %v1381, %v1451
        %1453 = vdwg.mxu0
        %v1454 = vadd.f32 %v224, %v1024
        %v1455 = vadd.f32 %v225, %v1026
        %v1456 = vadd.f32 %v226, %v1237
        %v1457 = vadd.f32 %v227, %v1239
        %v1458 = vadd.f32 %v228, %v1450
        %v1459 = vadd.f32 %v229, %v1452
        %1460 = vst [vmem:[%s210] sm:$0xff] %v1454
        %1461 = vst [vmem:[%s210 + $0x8] sm:$0xff] %v1455
        %1462 = vst [vmem:[%s210 + $0x10] sm:$0xff] %v1456
        %1463 = vst [vmem:[%s210 + $0x18] sm:$0xff] %v1457
        %1464 = vst [vmem:[%s210 + $0x20] sm:$0xff] %v1458
        %1465 = vst [vmem:[%s210 + $0x28] sm:$0xff] %v1459
        %s1466 = sand.u32 %s103, 1
        %s1467 = scalar_lea.sflag [#allocation4], %s1466
        %s1468 = sand.u32 %s103, 1
        %s1469 = smul.addr %s1468, 48
        %s1470 = scalar_lea.vmem [#allocation7], %s1469
        // Predicated region
        $region41: #{tpu_custom_call.1} parent=27 // pred_check
          %p1471 = pneg %p113
        $region42: #{tpu_custom_call.1} parent=27 // pred_check_branch
          %1473 = sbr.rel (%p1471) target = $region44
        $region43: #{tpu_custom_call.1} parent=27 // pred_region
          %s1474 = smul.u32 6, %s26
          %s1476 = ssub.s32 768, 768
          %1477 = vsyncadd %s1467, %s1476
          %s1478 = smul.addr %s25, 12
          %s1479 = sadd.s32 %s1474, %s1478
          %s1480 = smul.addr %s1479, 128
          %s1481 = scalar_lea.hbm %s2, %s1480
          %s1483 = sshll.u32 %s1470, 4
          %s1484 = int_to_ptr.vmem [resolvable:$true] %s1483
          %1486 = dma.vmem_to_hbm [thread:$0]  %s1484, 768, %s1481, %s1467
        $region44: #{tpu_custom_call.1} parent=27 // pred_fallthru
          _
      $region28: #{tpu_custom_call.1} parent=5 // pred_fallthru
        _
      %p1487 = scmp.le.s32.totalorder 2, %s15
      // Predicated region
      $region45: #{tpu_custom_call.1} parent=5 // pred_check
        %p1488 = pneg %p1487
      $region46: #{tpu_custom_call.1} parent=5 // pred_check_branch
        %1490 = sbr.rel (%p1488) target = $region48
      $region47: #{tpu_custom_call.1} parent=5 // pred_region
        %s1491 = ssub.s32 %s15, 2
        // Predicated region
        $region49: #{tpu_custom_call.1} parent=47 // pred_check
          %p1492 = pneg %p119
        $region50: #{tpu_custom_call.1} parent=47 // pred_check_branch
          %1494 = sbr.rel (%p1492) target = $region52
        $region51: #{tpu_custom_call.1} parent=47 // pred_region
          %s1495 = sand.u32 %s104, 1
          %s1496 = scalar_lea.sflag [#allocation4], %s1495
          %s1497 = sand.u32 %s104, 1
          %s1498 = smul.addr %s1497, 48
          %s1499 = scalar_lea.vmem [#allocation7], %s1498
          %1500 = dma.done %s1496, 768
        $region52: #{tpu_custom_call.1} parent=47 // pred_fallthru
          _
      $region48: #{tpu_custom_call.1} parent=5 // pred_fallthru
        _
    $region6: #{tpu_custom_call.1} parent=1 // loop_footer
      %s19 = sadd.s32 1, %s15
    $region7: #{tpu_custom_call.1} parent=1 // loop_footer_branch
      %14 = sbr.rel target = $region3
    $region8: #{tpu_custom_call.1} parent=1 // loop_exit
      _
    %1501 = vsyncpa [#allocation3], 1
    %s1502 = scalar_lea.sflag [#allocation3], 1
    %1503 = vsyncpa %s1502, 1
    %1504 = vsyncpa [#allocation6], 1
    %s1505 = scalar_lea.sflag [#allocation6], 1
    %1506 = vsyncpa %s1505, 1
    %1507 = vsyncpa [#allocation4], 1
    %s1508 = scalar_lea.sflag [#allocation4], 1
    %1509 = vsyncpa %s1508, 1

</llo_original>
